<compile_context>
chip_gen: v7x
topology: tpu7x:2x2x1
jax: 0.10.0
libtpu: 0.0.40
codegen_flags: <defaults>
</compile_context>

<pallas_src>
import jax
import jax.numpy as jnp
from jax.experimental import pallas as pl
from jax.experimental.pallas import tpu as pltpu


# ----------------------------- Pallas kernel ------------------------------ #
def _fused_gcn_kernel(adj_ref, x_ref, w1_ref, b1_ref, w2_ref, b2_ref, out_ref):
    """Whole 2-layer GCN forward in one kernel invocation (everything in VMEM).

      xw1 = x @ W1                      (f32 MXU accumulate)
      h1  = relu(adj @ xw1 + b1)        (adj, xw1 in bf16; acc f32)
      xw2 = h1 @ W2                     (f32)
      out = adj @ xw2 + b2              (adj, xw2 in bf16; acc f32)
    """
    adj = adj_ref[...]  # (N, N) bf16 normalized adjacency

    # ---- layer 1 ----
    xw1 = jnp.dot(x_ref[...], w1_ref[...], preferred_element_type=jnp.float32)
    h1 = (
        jnp.dot(adj, xw1.astype(jnp.bfloat16), preferred_element_type=jnp.float32)
        + b1_ref[...]
    )
    h1 = jnp.maximum(h1, 0.0)

    # ---- layer 2 ----
    xw2 = jnp.dot(h1, w2_ref[...], preferred_element_type=jnp.float32)
    out = (
        jnp.dot(adj, xw2.astype(jnp.bfloat16), preferred_element_type=jnp.float32)
        + b2_ref[...]
    )
    out_ref[...] = out.astype(out_ref.dtype)


# ------------------------------ helpers ------------------------------------ #
def _round_up(v, m):
    return ((v + m - 1) // m) * m


def _pad_to(a, shape):
    """Zero-pad a 2-D array up to `shape` (trailing padding only)."""
    pads = [(0, t - s) for s, t in zip(a.shape, shape)]
    if all(p == (0, 0) for p in pads):
        return a
    return jnp.pad(a, pads)


def build_norm_adj(edge_index, num_nodes):
    """Dense symmetric GCN normalization: D^{-1/2} (A + I) D^{-1/2}."""
    adj = jnp.zeros((num_nodes, num_nodes), jnp.float32)
    adj = adj.at[edge_index[0], edge_index[1]].set(1.0)
    adj = jnp.maximum(adj, jnp.eye(num_nodes, dtype=jnp.float32))  # self-loops
    deg = adj.sum(axis=1)
    d_inv_sqrt = jnp.where(deg > 0, 1.0 / jnp.sqrt(deg), 0.0)
    return d_inv_sqrt[:, None] * adj * d_inv_sqrt[None, :]


def init_params(key, in_channels, hidden1=400, hidden2=800):
    """Glorot-uniform weights stored as (F_in, F_out) (== PyG W^T), zero bias."""
    k1, k2 = jax.random.split(key)

    def glorot(k, fan_in, fan_out):
        limit = jnp.sqrt(6.0 / (fan_in + fan_out))
        return jax.random.uniform(
            k, (fan_in, fan_out), jnp.float32, minval=-limit, maxval=limit
        )

    return {
        "w1": glorot(k1, in_channels, hidden1),
        "b1": jnp.zeros((1, hidden1), jnp.float32),
        "w2": glorot(k2, hidden1, hidden2),
        "b2": jnp.zeros((1, hidden2), jnp.float32),
    }


# ------------------------------ forward ------------------------------------ #
def gcn_encoder_forward(x, edge_index, params, *, lane=128):
    n, f_in = x.shape
    h1 = params["w1"].shape[1]   # 400
    h2 = params["w2"].shape[1]   # 800
    h1_pad = _round_up(h1, lane)  # 512  (lane-dense intermediate / MXU aligned)
    h2_pad = _round_up(h2, lane)  # 896  (lane-dense output stores)

    # Normalized adjacency, cast to bf16 for full-rate MXU aggregation.
    norm_adj = build_norm_adj(edge_index, n).astype(jnp.bfloat16)

    # Zero-pad weights/biases to lane multiples; padded columns of layer 1
    # produce relu(0 + 0) = 0 and padded rows of W2 contribute nothing, so the
    # math on the first `h2` output columns is unchanged.
    w1p = _pad_to(params["w1"], (f_in, h1_pad))
    b1p = _pad_to(params["b1"], (1, h1_pad))
    w2p = _pad_to(params["w2"], (h1_pad, h2_pad))
    b2p = _pad_to(params["b2"], (1, h2_pad))

    out_pad = pl.pallas_call(
        _fused_gcn_kernel,
        out_shape=jax.ShapeDtypeStruct((n, h2_pad), jnp.float32),
        grid_spec=pltpu.PrefetchScalarGridSpec(
            num_scalar_prefetch=0,
            grid=(1,),  # whole problem resident in VMEM -> single grid step
            in_specs=[
                pl.BlockSpec((n, n), lambda i: (0, 0)),          # norm_adj (bf16)
                pl.BlockSpec((n, f_in), lambda i: (0, 0)),       # x
                pl.BlockSpec((f_in, h1_pad), lambda i: (0, 0)),  # W1 (padded)
                pl.BlockSpec((1, h1_pad), lambda i: (0, 0)),     # b1 (padded)
                pl.BlockSpec((h1_pad, h2_pad), lambda i: (0, 0)),# W2 (padded)
                pl.BlockSpec((1, h2_pad), lambda i: (0, 0)),     # b2 (padded)
            ],
            out_specs=pl.BlockSpec((n, h2_pad), lambda i: (0, 0)),
        ),
        compiler_params=pltpu.CompilerParams(
            dimension_semantics=("arbitrary",),
        ),
    )(norm_adj, x, w1p, b1p, w2p, b2p)

    # Strip the lane padding back to the module's true output width.
    return out_pad[:, :h2]


# ------------------------------- main -------------------------------------- #
if __name__ == "__main__":
    N = 64            # number of nodes (small)
    IN_CHANNELS = 32  # input feature dim (small)

    key = jax.random.PRNGKey(0)
    k_adj, k_x, k_params = jax.random.split(key, 3)

    # Deterministic random undirected graph, no self-loops,
    # edge_index = nonzero(A) -- mirrors torch .nonzero().t().contiguous().
    a = (jax.random.uniform(k_adj, (N, N)) < 0.08).astype(jnp.float32)
    a = jnp.maximum(a, a.T)
    a = a * (1.0 - jnp.eye(N, dtype=jnp.float32))
    rows, cols = jnp.nonzero(a)
    edge_index = jnp.stack([rows, cols]).astype(jnp.int32)

    x = jax.random.normal(k_x, (N, IN_CHANNELS), jnp.float32)
    params = init_params(k_params, IN_CHANNELS)

    out = gcn_encoder_forward(x, edge_index, params)
    jax.block_until_ready(out)

    assert out.shape == (N, 800), out.shape
    assert out.dtype == jnp.float32
    print("KERNEL_OK")
</pallas_src>

<mosaic_0001>
module attributes {stable_mosaic.version = 11 : i64} {
  func.func @_fused_gcn_kernel(%arg0: i32, %arg1: memref<64x64xbf16, #tpu.memory_space<vmem>>, %arg2: memref<64x32xf32, #tpu.memory_space<vmem>>, %arg3: memref<32x512xf32, #tpu.memory_space<vmem>>, %arg4: memref<1x512xf32, #tpu.memory_space<vmem>>, %arg5: memref<512x896xf32, #tpu.memory_space<vmem>>, %arg6: memref<1x896xf32, #tpu.memory_space<vmem>>, %arg7: memref<64x896xf32, #tpu.memory_space<vmem>>) attributes {dimension_semantics = [#tpu.dimension_semantics<arbitrary>], iteration_bounds = array<i64: 1>, scalar_prefetch = 0 : i64, scratch_operands = 0 : i64, tpu.core_type = #tpu.core_type<tc>, window_params = [{pipeline_mode = #tpu.pipeline_mode<synchronous>, transform_indices = @transform_0, window_bounds = array<i64: 64, 64>}, {pipeline_mode = #tpu.pipeline_mode<synchronous>, transform_indices = @transform_1, window_bounds = array<i64: 64, 32>}, {pipeline_mode = #tpu.pipeline_mode<synchronous>, transform_indices = @transform_2, window_bounds = array<i64: 32, 512>}, {pipeline_mode = #tpu.pipeline_mode<synchronous>, transform_indices = @transform_3, window_bounds = array<i64: 1, 512>}, {pipeline_mode = #tpu.pipeline_mode<synchronous>, transform_indices = @transform_4, window_bounds = array<i64: 512, 896>}, {pipeline_mode = #tpu.pipeline_mode<synchronous>, transform_indices = @transform_5, window_bounds = array<i64: 1, 896>}, {pipeline_mode = #tpu.pipeline_mode<synchronous>, transform_indices = @transform_6, window_bounds = array<i64: 64, 896>}]} {
    %c0 = arith.constant 0 : index
    %c0_0 = arith.constant 0 : index
    %0 = vector.load %arg1[%c0, %c0_0] : memref<64x64xbf16, #tpu.memory_space<vmem>>, vector<64x64xbf16>
    %c0_1 = arith.constant 0 : index
    %c0_2 = arith.constant 0 : index
    %1 = vector.load %arg2[%c0_1, %c0_2] : memref<64x32xf32, #tpu.memory_space<vmem>>, vector<64x32xf32>
    %c0_3 = arith.constant 0 : index
    %c0_4 = arith.constant 0 : index
    %2 = vector.load %arg3[%c0_3, %c0_4] : memref<32x512xf32, #tpu.memory_space<vmem>>, vector<32x512xf32>
    %cst = arith.constant dense<0.000000e+00> : vector<64x512xf32>
    %3 = tpu.matmul %1, %2, %cst {dimension_numbers = #tpu.dot_dimension_numbers<[1], [0], [0], [1], [0, 0, 1, 1], [], []>} : vector<64x32xf32>, vector<32x512xf32>, vector<64x512xf32> -> vector<64x512xf32>
    %4 = arith.truncf %3 : vector<64x512xf32> to vector<64x512xbf16>
    %cst_5 = arith.constant dense<0.000000e+00> : vector<64x512xf32>
    %5 = tpu.matmul %0, %4, %cst_5 {dimension_numbers = #tpu.dot_dimension_numbers<[1], [0], [0], [1], [0, 0, 1, 1], [], []>} : vector<64x64xbf16>, vector<64x512xbf16>, vector<64x512xf32> -> vector<64x512xf32>
    %c0_6 = arith.constant 0 : index
    %c0_7 = arith.constant 0 : index
    %6 = vector.load %arg4[%c0_6, %c0_7] : memref<1x512xf32, #tpu.memory_space<vmem>>, vector<1x512xf32>
    %7 = vector.broadcast %6 : vector<1x512xf32> to vector<64x512xf32>
    %8 = arith.addf %5, %7 : vector<64x512xf32>
    %cst_8 = arith.constant 0.000000e+00 : f32
    %9 = vector.broadcast %cst_8 : f32 to vector<64x512xf32>
    %10 = arith.maximumf %8, %9 : vector<64x512xf32>
    %c0_9 = arith.constant 0 : index
    %c0_10 = arith.constant 0 : index
    %11 = vector.load %arg5[%c0_9, %c0_10] : memref<512x896xf32, #tpu.memory_space<vmem>>, vector<512x896xf32>
    %cst_11 = arith.constant dense<0.000000e+00> : vector<64x896xf32>
    %12 = tpu.matmul %10, %11, %cst_11 {dimension_numbers = #tpu.dot_dimension_numbers<[1], [0], [0], [1], [0, 0, 1, 1], [], []>} : vector<64x512xf32>, vector<512x896xf32>, vector<64x896xf32> -> vector<64x896xf32>
    %13 = arith.truncf %12 : vector<64x896xf32> to vector<64x896xbf16>
    %cst_12 = arith.constant dense<0.000000e+00> : vector<64x896xf32>
    %14 = tpu.matmul %0, %13, %cst_12 {dimension_numbers = #tpu.dot_dimension_numbers<[1], [0], [0], [1], [0, 0, 1, 1], [], []>} : vector<64x64xbf16>, vector<64x896xbf16>, vector<64x896xf32> -> vector<64x896xf32>
    %c0_13 = arith.constant 0 : index
    %c0_14 = arith.constant 0 : index
    %15 = vector.load %arg6[%c0_13, %c0_14] : memref<1x896xf32, #tpu.memory_space<vmem>>, vector<1x896xf32>
    %16 = vector.broadcast %15 : vector<1x896xf32> to vector<64x896xf32>
    %17 = arith.addf %14, %16 : vector<64x896xf32>
    %c0_15 = arith.constant 0 : index
    %c0_16 = arith.constant 0 : index
    %18 = vector.load %arg7[%c0_15, %c0_16] : memref<64x896xf32, #tpu.memory_space<vmem>>, vector<64x896xf32>
    tpu.vector_store %arg7[%c0_15, %c0_16], %17 {strides = array<i32>} : memref<64x896xf32, #tpu.memory_space<vmem>>, vector<64x896xf32>,
    return
  }
  func.func @transform_0(%arg0: i32) -> (i32, i32) {
    %c0_i32 = arith.constant 0 : i32
    %c0_i32_0 = arith.constant 0 : i32
    %c0_i32_1 = arith.constant 0 : i32
    return %c0_i32, %c0_i32_0 : i32, i32
  }
  func.func @transform_1(%arg0: i32) -> (i32, i32) {
    %c0_i32 = arith.constant 0 : i32
    %c0_i32_0 = arith.constant 0 : i32
    %c0_i32_1 = arith.constant 0 : i32
    return %c0_i32, %c0_i32_0 : i32, i32
  }
  func.func @transform_2(%arg0: i32) -> (i32, i32) {
    %c0_i32 = arith.constant 0 : i32
    %c0_i32_0 = arith.constant 0 : i32
    %c0_i32_1 = arith.constant 0 : i32
    return %c0_i32, %c0_i32_0 : i32, i32
  }
  func.func @transform_3(%arg0: i32) -> (i32, i32) {
    %c0_i32 = arith.constant 0 : i32
    %c0_i32_0 = arith.constant 0 : i32
    %c0_i32_1 = arith.constant 0 : i32
    return %c0_i32, %c0_i32_0 : i32, i32
  }
  func.func @transform_4(%arg0: i32) -> (i32, i32) {
    %c0_i32 = arith.constant 0 : i32
    %c0_i32_0 = arith.constant 0 : i32
    %c0_i32_1 = arith.constant 0 : i32
    return %c0_i32, %c0_i32_0 : i32, i32
  }
  func.func @transform_5(%arg0: i32) -> (i32, i32) {
    %c0_i32 = arith.constant 0 : i32
    %c0_i32_0 = arith.constant 0 : i32
    %c0_i32_1 = arith.constant 0 : i32
    return %c0_i32, %c0_i32_0 : i32, i32
  }
  func.func @transform_6(%arg0: i32) -> (i32, i32) {
    %c0_i32 = arith.constant 0 : i32
    %c0_i32_0 = arith.constant 0 : i32
    %c0_i32_1 = arith.constant 0 : i32
    return %c0_i32, %c0_i32_0 : i32, i32
  }
}

</mosaic_0001>

<llo_original>
// kernel: tpu_custom_call.1
$region0: #{tpu_custom_call.1}
  #allocation0 [shape = 'u32[]', space=smem, size = 0x4, offset = 0x4, fixed_abs, tag = 'smem constant byte address 0x4 - core index']
  #allocation1 [shape = 'u32[144,128]{1,0:T(1,128)}', space=vmem, size = 0x12000, scoped, tag = 'internal scratch']
  %s0 = inlined_call_operand.hbm [shape: bf16[64,64], index: 0, kind: input, shape index: {}]
  %s1 = inlined_call_operand.vmem [shape: f32[64,32], index: 1, kind: input, shape index: {}]
  %s2 = inlined_call_operand.hbm [shape: f32[32,512], index: 2, kind: input, shape index: {}]
  %s3 = inlined_call_operand.hbm [shape: f32[1,512], index: 3, kind: input, shape index: {}]
  %s4 = inlined_call_operand.hbm [shape: f32[512,896], index: 4, kind: input, shape index: {}]
  %s5 = inlined_call_operand.hbm [shape: f32[1,896], index: 5, kind: input, shape index: {}]
  %s6 = inlined_call_operand.hbm [shape: f32[64,896], index: 6, kind: output, shape index: {}]
  %s7 = sld [smem:[#allocation0]]
  $region54: #{tpu_custom_call.1} parent=0
    _
  %s9 = ssub.s32 1, %s7
  %s10 = scalar_select 0, %s9, %s7
  $region1: #{tpu_custom_call.1} parent=0
    #allocation2 [shape = 'u8[16384]{0}', space=vmem, size = 0x4000, scoped, tag = 'input window, operand 0, single buffered']
    #allocation3 [shape = 's32[1]{0}', space=sflag, size = 0x4, scoped, tag = 'scoped memory for tpu_custom_call.1']
    #allocation4 [shape = 's32[1]{0}', space=sflag, size = 0x4, scoped, tag = 'scoped memory for tpu_custom_call.1']
    #allocation5 [shape = 'u8[65536]{0}', space=vmem, size = 0x10000, scoped, tag = 'input window, operand 2, single buffered']
    #allocation6 [shape = 's32[1]{0}', space=sflag, size = 0x4, scoped, tag = 'scoped memory for tpu_custom_call.1']
    #allocation7 [shape = 'u8[2048]{0}', space=vmem, size = 0x800, scoped, tag = 'input window, operand 3, single buffered']
    #allocation8 [shape = 'u8[1835008]{0}', space=vmem, size = 0x1c0000, scoped, tag = 'input window, operand 4, single buffered']
    #allocation9 [shape = 's32[1]{0}', space=sflag, size = 0x4, scoped, tag = 'scoped memory for tpu_custom_call.1']
    #allocation10 [shape = 'u8[3584]{0}', space=vmem, size = 0x1000, scoped, tag = 'input window, operand 5, single buffered']
    #allocation11 [shape = 'u8[229376]{0}', space=vmem, size = 0x38000, scoped, tag = 'output window, operand 0, single buffered']
    %11 = vsyncpa [#allocation3], 0
    %12 = vsyncpa [#allocation6], 0
    %13 = vsyncpa [#allocation9], 0
    %14 = vsyncpa [#allocation4], 0
    // Predicated region
    $region2: #{tpu_custom_call.1} parent=1 // pred_check
      _
    $region3: #{tpu_custom_call.1} parent=1 // pred_check_branch
      %16 = sbr.rel (0) target = $region5
    $region4: #{tpu_custom_call.1} parent=1 // pred_region
      %s18 = ssub.s32 512, 512
      %19 = vsyncadd [#allocation3], %s18
      %s20 = sshll.u32 [#allocation2], 4
      %s21 = int_to_ptr.vmem [resolvable:$true] %s20
      %26 = dma.hbm_to_vmem [thread:$0]  %s0, 512, %s21, [#allocation3], 64, 64, 4
    $region5: #{tpu_custom_call.1} parent=1 // pred_fallthru
      _
    // Predicated region
    $region6: #{tpu_custom_call.1} parent=1 // pred_check
      _
    $region7: #{tpu_custom_call.1} parent=1 // pred_check_branch
      %28 = sbr.rel (0) target = $region9
    $region8: #{tpu_custom_call.1} parent=1 // pred_region
      _
    $region9: #{tpu_custom_call.1} parent=1 // pred_fallthru
      _
    // Predicated region
    $region10: #{tpu_custom_call.1} parent=1 // pred_check
      _
    $region11: #{tpu_custom_call.1} parent=1 // pred_check_branch
      %30 = sbr.rel (0) target = $region13
    $region12: #{tpu_custom_call.1} parent=1 // pred_region
      %s32 = ssub.s32 2048, 2048
      %33 = vsyncadd [#allocation6], %s32
      %s34 = sshll.u32 [#allocation5], 4
      %s35 = int_to_ptr.vmem [resolvable:$true] %s34
      %40 = dma.hbm_to_vmem [thread:$0]  %s2, 2048, %s35, [#allocation6], 512, 512, 32
    $region13: #{tpu_custom_call.1} parent=1 // pred_fallthru
      _
    // Predicated region
    $region14: #{tpu_custom_call.1} parent=1 // pred_check
      _
    $region15: #{tpu_custom_call.1} parent=1 // pred_check_branch
      %42 = sbr.rel (0) target = $region17
    $region16: #{tpu_custom_call.1} parent=1 // pred_region
      %s44 = ssub.s32 64, 64
      %45 = vsyncadd [#allocation6], %s44
      %s47 = sshll.u32 [#allocation7], 4
      %s48 = int_to_ptr.vmem [resolvable:$true] %s47
      %50 = dma.hbm_to_vmem [thread:$0]  %s3, 64, %s48, [#allocation6]
    $region17: #{tpu_custom_call.1} parent=1 // pred_fallthru
      _
    // Predicated region
    $region18: #{tpu_custom_call.1} parent=1 // pred_check
      _
    $region19: #{tpu_custom_call.1} parent=1 // pred_check_branch
      %52 = sbr.rel (0) target = $region21
    $region20: #{tpu_custom_call.1} parent=1 // pred_region
      %s54 = ssub.s32 57344, 57344
      %55 = vsyncadd [#allocation9], %s54
      %s56 = sshll.u32 [#allocation8], 4
      %s57 = int_to_ptr.vmem [resolvable:$true] %s56
      %62 = dma.hbm_to_vmem [thread:$0]  %s4, 57344, %s57, [#allocation9], 896, 896, 56
    $region21: #{tpu_custom_call.1} parent=1 // pred_fallthru
      _
    // Predicated region
    $region22: #{tpu_custom_call.1} parent=1 // pred_check
      _
    $region23: #{tpu_custom_call.1} parent=1 // pred_check_branch
      %64 = sbr.rel (0) target = $region25
    $region24: #{tpu_custom_call.1} parent=1 // pred_region
      %s66 = ssub.s32 112, 112
      %67 = vsyncadd [#allocation9], %s66
      %s69 = sshll.u32 [#allocation10], 4
      %s70 = int_to_ptr.vmem [resolvable:$true] %s69
      %72 = dma.hbm_to_vmem [thread:$0]  %s5, 112, %s70, [#allocation9]
    $region25: #{tpu_custom_call.1} parent=1 // pred_fallthru
      _
    // Predicated region
    $region26: #{tpu_custom_call.1} parent=1 // pred_check
      _
    $region27: #{tpu_custom_call.1} parent=1 // pred_check_branch
      %74 = sbr.rel (0) target = $region29
    $region28: #{tpu_custom_call.1} parent=1 // pred_region
      %75 = dma.done [#allocation3], 512
    $region29: #{tpu_custom_call.1} parent=1 // pred_fallthru
      _
    // Predicated region
    $region30: #{tpu_custom_call.1} parent=1 // pred_check
      _
    $region31: #{tpu_custom_call.1} parent=1 // pred_check_branch
      %77 = sbr.rel (0) target = $region33
    $region32: #{tpu_custom_call.1} parent=1 // pred_region
      %78 = dma.done [#allocation6], 2048
    $region33: #{tpu_custom_call.1} parent=1 // pred_fallthru
      _
    // Predicated region
    $region34: #{tpu_custom_call.1} parent=1 // pred_check
      _
    $region35: #{tpu_custom_call.1} parent=1 // pred_check_branch
      %80 = sbr.rel (0) target = $region37
    $region36: #{tpu_custom_call.1} parent=1 // pred_region
      %81 = dma.done [#allocation6], 64
    $region37: #{tpu_custom_call.1} parent=1 // pred_fallthru
      _
    // Predicated region
    $region38: #{tpu_custom_call.1} parent=1 // pred_check
      _
    $region39: #{tpu_custom_call.1} parent=1 // pred_check_branch
      %83 = sbr.rel (0) target = $region41
    $region40: #{tpu_custom_call.1} parent=1 // pred_region
      %84 = dma.done [#allocation9], 57344
    $region41: #{tpu_custom_call.1} parent=1 // pred_fallthru
      _
    // Predicated region
    $region42: #{tpu_custom_call.1} parent=1 // pred_check
      _
    $region43: #{tpu_custom_call.1} parent=1 // pred_check_branch
      %86 = sbr.rel (0) target = $region45
    $region44: #{tpu_custom_call.1} parent=1 // pred_region
      %87 = dma.done [#allocation9], 112
    $region45: #{tpu_custom_call.1} parent=1 // pred_fallthru
      _
    %v89 = vld [vmem:[#allocation2] sm:$0xf]
    %v90 = vld [vmem:[#allocation2 + $0x4] sm:$0xf]
    %v91 = vld [vmem:[#allocation2 + $0x8] sm:$0xf]
    %v92 = vld [vmem:[#allocation2 + $0xc] sm:$0xf]
    %v93 = vld [vmem:[#allocation2 + $0x10] sm:$0xf]
    %v94 = vld [vmem:[#allocation2 + $0x14] sm:$0xf]
    %v95 = vld [vmem:[#allocation2 + $0x18] sm:$0xf]
    %v96 = vld [vmem:[#allocation2 + $0x1c] sm:$0xf]
    %v97 = vld [vmem:[%s1] sm:$0xff]
    %v98 = vld [vmem:[%s1 + $0x8] sm:$0xff]
    %v99 = vld [vmem:[%s1 + $0x10] sm:$0xff]
    %v100 = vld [vmem:[%s1 + $0x18] sm:$0xff]
    %v101 = vld [vmem:[%s1 + $0x20] sm:$0xff]
    %v102 = vld [vmem:[%s1 + $0x28] sm:$0xff]
    %v103 = vld [vmem:[%s1 + $0x30] sm:$0xff]
    %v104 = vld [vmem:[%s1 + $0x38] sm:$0xff]
    %v105 = vld [vmem:[#allocation5] sm:$0xff]
    %v106 = vld [vmem:[#allocation5 + $0x8] sm:$0xff]
    %v107 = vld [vmem:[#allocation5 + $0x10] sm:$0xff]
    %v108 = vld [vmem:[#allocation5 + $0x18] sm:$0xff]
    %v109 = vld [vmem:[#allocation5 + $0x20] sm:$0xff]
    %v110 = vld [vmem:[#allocation5 + $0x28] sm:$0xff]
    %v111 = vld [vmem:[#allocation5 + $0x30] sm:$0xff]
    %v112 = vld [vmem:[#allocation5 + $0x38] sm:$0xff]
    %v113 = vld [vmem:[#allocation5 + $0x40] sm:$0xff]
    %v114 = vld [vmem:[#allocation5 + $0x48] sm:$0xff]
    %v115 = vld [vmem:[#allocation5 + $0x50] sm:$0xff]
    %v116 = vld [vmem:[#allocation5 + $0x58] sm:$0xff]
    %v117 = vld [vmem:[#allocation5 + $0x60] sm:$0xff]
    %v118 = vld [vmem:[#allocation5 + $0x68] sm:$0xff]
    %v119 = vld [vmem:[#allocation5 + $0x70] sm:$0xff]
    %v120 = vld [vmem:[#allocation5 + $0x78] sm:$0xff]
    %vm121 = vcmask 261120
    %v123 = vsel %vm121, %v97, 0
    %v126 = vsel %vm121, %v98, 0
    %v129 = vsel %vm121, %v99, 0
    %v132 = vsel %vm121, %v100, 0
    %v135 = vsel %vm121, %v101, 0
    %v138 = vsel %vm121, %v102, 0
    %v141 = vsel %vm121, %v103, 0
    %v144 = vsel %vm121, %v104, 0
    %146 = vmatprep.subr.mxu0 %v106
    %147 = vmatpush1.msra.mxu0 %v105
    %148 = vmatprep.subr.mxu0 %v110
    %149 = vmatpush1.msra.mxu0 %v109
    %150 = vmatprep.subr.mxu0 %v114
    %151 = vmatpush1.msra.mxu0 %v113
    %152 = vmatprep.subr.mxu0 %v118
    %153 = vmatpush1.msra.mxu0 %v117
    %154 = vmatprep.subr.mxu0 0.0
    %155 = vmatpush1.msra.mxu0 0.0
    %156 = vmatprep.subr.mxu0 0.0
    %157 = vmatpush1.msra.mxu0 0.0
    %158 = vmatprep.subr.mxu0 0.0
    %159 = vmatpush1.msra.mxu0 0.0
    %160 = vmatprep.subr.mxu0 0.0
    %161 = vmatpush1.msra.mxu0 0.0
    %162 = vmatprep.subr.mxu0 0.0
    %163 = vmatpush1.msra.mxu0 0.0
    %164 = vmatprep.subr.mxu0 0.0
    %165 = vmatpush1.msra.mxu0 0.0
    %166 = vmatprep.subr.mxu0 0.0
    %167 = vmatpush1.msra.mxu0 0.0
    %168 = vmatprep.subr.mxu0 0.0
    %169 = vmatpush1.msra.mxu0 0.0
    %170 = vmatprep.subr.mxu0 0.0
    %171 = vmatpush1.msra.mxu0 0.0
    %172 = vmatprep.subr.mxu0 0.0
    %173 = vmatpush1.msra.mxu0 0.0
    %174 = vmatprep.subr.mxu0 0.0
    %175 = vmatpush1.msra.mxu0 0.0
    %176 = vmatprep.subr.mxu0 0.0
    %177 = vmatpush1.msra.mxu0 0.0
    %178 = vmatprep.subr.mxu0 0.0
    %179 = vmatpush1.msra.mxu0 0.0
    %180 = vmatprep.subr.mxu0 0.0
    %181 = vmatpush1.msra.mxu0 0.0
    %182 = vmatprep.subr.mxu0 0.0
    %183 = vmatpush1.msra.mxu0 0.0
    %184 = vmatprep.subr.mxu0 0.0
    %185 = vmatpush1.msra.mxu0 0.0
    %186 = vmatprep.subr.mxu0 0.0
    %187 = vmatpush1.msra.mxu0 0.0
    %188 = vmatprep.subr.mxu0 0.0
    %189 = vmatpush1.msra.mxu0 0.0
    %190 = vmatprep.subr.mxu0 0.0
    %191 = vmatpush1.msra.mxu0 0.0
    %192 = vmatprep.subr.mxu0 0.0
    %193 = vmatpush1.msra.mxu0 0.0
    %194 = vmatprep.subr.mxu0 0.0
    %195 = vmatpush1.msra.mxu0 0.0
    %196 = vmatprep.subr.mxu0 0.0
    %197 = vmatpush1.msra.mxu0 0.0
    %198 = vmatprep.subr.mxu0 0.0
    %199 = vmatpush1.msra.mxu0 0.0
    %200 = vmatprep.subr.mxu0 0.0
    %201 = vmatpush1.msra.mxu0 0.0
    %202 = vmatprep.subr.mxu0 0.0
    %203 = vmatpush1.msra.mxu0 0.0
    %204 = vmatprep.subr.mxu0 0.0
    %205 = vmatpush1.msra.mxu0 0.0
    %206 = vmatprep.subr.mxu0 0.0
    %207 = vmatpush1.msra.mxu0 0.0
    %208 = vmatprep.subr.mxu0 0.0
    %209 = vmatpush1.msra.mxu0 0.0
    %210 = vmatprep.mubr.f32.mxu0 0.0
    %211 = vmatmul.mubr.f32.gmra.mrb[0].mxu0 %v123
    %v212 = vpop.f32.mrb[0].mxu0
    %v213 = vadd.f32 0.0, %v212
    %v214 = vpop.f32.mrb[0].mxu0
    %v215 = vadd.f32 0.0, %v214
    %216 = vmatprep.mubr.f32.mxu0 0.0
    %217 = vmatmul.mubr.f32.gmra.mrb[0].mxu0 %v126
    %v218 = vpop.f32.mrb[0].mxu0
    %v219 = vadd.f32 0.0, %v218
    %v220 = vpop.f32.mrb[0].mxu0
    %v221 = vadd.f32 0.0, %v220
    %222 = vmatprep.mubr.f32.mxu0 0.0
    %223 = vmatmul.mubr.f32.gmra.mrb[0].mxu0 %v129
    %v224 = vpop.f32.mrb[0].mxu0
    %v225 = vadd.f32 0.0, %v224
    %v226 = vpop.f32.mrb[0].mxu0
    %v227 = vadd.f32 0.0, %v226
    %228 = vmatprep.mubr.f32.mxu0 0.0
    %229 = vmatmul.mubr.f32.gmra.mrb[0].mxu0 %v132
    %v230 = vpop.f32.mrb[0].mxu0
    %v231 = vadd.f32 0.0, %v230
    %v232 = vpop.f32.mrb[0].mxu0
    %v233 = vadd.f32 0.0, %v232
    %234 = vmatprep.mubr.f32.mxu0 0.0
    %235 = vmatmul.mubr.f32.gmra.mrb[0].mxu0 %v135
    %v236 = vpop.f32.mrb[0].mxu0
    %v237 = vadd.f32 0.0, %v236
    %v238 = vpop.f32.mrb[0].mxu0
    %v239 = vadd.f32 0.0, %v238
    %240 = vmatprep.mubr.f32.mxu0 0.0
    %241 = vmatmul.mubr.f32.gmra.mrb[0].mxu0 %v138
    %v242 = vpop.f32.mrb[0].mxu0
    %v243 = vadd.f32 0.0, %v242
    %v244 = vpop.f32.mrb[0].mxu0
    %v245 = vadd.f32 0.0, %v244
    %246 = vmatprep.mubr.f32.mxu0 0.0
    %247 = vmatmul.mubr.f32.gmra.mrb[0].mxu0 %v141
    %v248 = vpop.f32.mrb[0].mxu0
    %v249 = vadd.f32 0.0, %v248
    %v250 = vpop.f32.mrb[0].mxu0
    %v251 = vadd.f32 0.0, %v250
    %252 = vmatprep.mubr.f32.mxu0 0.0
    %253 = vmatmul.mubr.f32.gmra.mrb[0].mxu0 %v144
    %v254 = vpop.f32.mrb[0].mxu0
    %v255 = vadd.f32 0.0, %v254
    %v256 = vpop.f32.mrb[0].mxu0
    %v257 = vadd.f32 0.0, %v256
    %258 = vdwg.mxu0
    %259 = vmatprep.subr.mxu0 %v108
    %260 = vmatpush1.msra.mxu0 %v107
    %261 = vmatprep.subr.mxu0 %v112
    %262 = vmatpush1.msra.mxu0 %v111
    %263 = vmatprep.subr.mxu0 %v116
    %264 = vmatpush1.msra.mxu0 %v115
    %265 = vmatprep.subr.mxu0 %v120
    %266 = vmatpush1.msra.mxu0 %v119
    %267 = vmatprep.subr.mxu0 0.0
    %268 = vmatpush1.msra.mxu0 0.0
    %269 = vmatprep.subr.mxu0 0.0
    %270 = vmatpush1.msra.mxu0 0.0
    %271 = vmatprep.subr.mxu0 0.0
    %272 = vmatpush1.msra.mxu0 0.0
    %273 = vmatprep.subr.mxu0 0.0
    %274 = vmatpush1.msra.mxu0 0.0
    %275 = vmatprep.subr.mxu0 0.0
    %276 = vmatpush1.msra.mxu0 0.0
    %277 = vmatprep.subr.mxu0 0.0
    %278 = vmatpush1.msra.mxu0 0.0
    %279 = vmatprep.subr.mxu0 0.0
    %280 = vmatpush1.msra.mxu0 0.0
    %281 = vmatprep.subr.mxu0 0.0
    %282 = vmatpush1.msra.mxu0 0.0
    %283 = vmatprep.subr.mxu0 0.0
    %284 = vmatpush1.msra.mxu0 0.0
    %285 = vmatprep.subr.mxu0 0.0
    %286 = vmatpush1.msra.mxu0 0.0
    %287 = vmatprep.subr.mxu0 0.0
    %288 = vmatpush1.msra.mxu0 0.0
    %289 = vmatprep.subr.mxu0 0.0
    %290 = vmatpush1.msra.mxu0 0.0
    %291 = vmatprep.subr.mxu0 0.0
    %292 = vmatpush1.msra.mxu0 0.0
    %293 = vmatprep.subr.mxu0 0.0
    %294 = vmatpush1.msra.mxu0 0.0
    %295 = vmatprep.subr.mxu0 0.0
    %296 = vmatpush1.msra.mxu0 0.0
    %297 = vmatprep.subr.mxu0 0.0
    %298 = vmatpush1.msra.mxu0 0.0
    %299 = vmatprep.subr.mxu0 0.0
    %300 = vmatpush1.msra.mxu0 0.0
    %301 = vmatprep.subr.mxu0 0.0
    %302 = vmatpush1.msra.mxu0 0.0
    %303 = vmatprep.subr.mxu0 0.0
    %304 = vmatpush1.msra.mxu0 0.0
    %305 = vmatprep.subr.mxu0 0.0
    %306 = vmatpush1.msra.mxu0 0.0
    %307 = vmatprep.subr.mxu0 0.0
    %308 = vmatpush1.msra.mxu0 0.0
    %309 = vmatprep.subr.mxu0 0.0
    %310 = vmatpush1.msra.mxu0 0.0
    %311 = vmatprep.subr.mxu0 0.0
    %312 = vmatpush1.msra.mxu0 0.0
    %313 = vmatprep.subr.mxu0 0.0
    %314 = vmatpush1.msra.mxu0 0.0
    %315 = vmatprep.subr.mxu0 0.0
    %316 = vmatpush1.msra.mxu0 0.0
    %317 = vmatprep.subr.mxu0 0.0
    %318 = vmatpush1.msra.mxu0 0.0
    %319 = vmatprep.subr.mxu0 0.0
    %320 = vmatpush1.msra.mxu0 0.0
    %321 = vmatprep.subr.mxu0 0.0
    %322 = vmatpush1.msra.mxu0 0.0
    %323 = vmatprep.mubr.f32.mxu0 0.0
    %324 = vmatmul.mubr.f32.gmra.mrb[0].mxu0 %v123
    %v325 = vpop.f32.mrb[0].mxu0
    %v326 = vadd.f32 0.0, %v325
    %v327 = vpop.f32.mrb[0].mxu0
    %v328 = vadd.f32 0.0, %v327
    %329 = vmatprep.mubr.f32.mxu0 0.0
    %330 = vmatmul.mubr.f32.gmra.mrb[0].mxu0 %v126
    %v331 = vpop.f32.mrb[0].mxu0
    %v332 = vadd.f32 0.0, %v331
    %v333 = vpop.f32.mrb[0].mxu0
    %v334 = vadd.f32 0.0, %v333
    %335 = vmatprep.mubr.f32.mxu0 0.0
    %336 = vmatmul.mubr.f32.gmra.mrb[0].mxu0 %v129
    %v337 = vpop.f32.mrb[0].mxu0
    %v338 = vadd.f32 0.0, %v337
    %v339 = vpop.f32.mrb[0].mxu0
    %v340 = vadd.f32 0.0, %v339
    %341 = vmatprep.mubr.f32.mxu0 0.0
    %342 = vmatmul.mubr.f32.gmra.mrb[0].mxu0 %v132
    %v343 = vpop.f32.mrb[0].mxu0
    %v344 = vadd.f32 0.0, %v343
    %v345 = vpop.f32.mrb[0].mxu0
    %v346 = vadd.f32 0.0, %v345
    %347 = vmatprep.mubr.f32.mxu0 0.0
    %348 = vmatmul.mubr.f32.gmra.mrb[0].mxu0 %v135
    %v349 = vpop.f32.mrb[0].mxu0
    %v350 = vadd.f32 0.0, %v349
    %v351 = vpop.f32.mrb[0].mxu0
    %v352 = vadd.f32 0.0, %v351
    %353 = vmatprep.mubr.f32.mxu0 0.0
    %354 = vmatmul.mubr.f32.gmra.mrb[0].mxu0 %v138
    %v355 = vpop.f32.mrb[0].mxu0
    %v356 = vadd.f32 0.0, %v355
    %v357 = vpop.f32.mrb[0].mxu0
    %v358 = vadd.f32 0.0, %v357
    %359 = vmatprep.mubr.f32.mxu0 0.0
    %360 = vmatmul.mubr.f32.gmra.mrb[0].mxu0 %v141
    %v361 = vpop.f32.mrb[0].mxu0
    %v362 = vadd.f32 0.0, %v361
    %v363 = vpop.f32.mrb[0].mxu0
    %v364 = vadd.f32 0.0, %v363
    %365 = vmatprep.mubr.f32.mxu0 0.0
    %366 = vmatmul.mubr.f32.gmra.mrb[0].mxu0 %v144
    %v367 = vpop.f32.mrb[0].mxu0
    %v368 = vadd.f32 0.0, %v367
    %v369 = vpop.f32.mrb[0].mxu0
    %v370 = vadd.f32 0.0, %v369
    %371 = vdwg.mxu0
    %v372 = vpack.c.bf16 %v219, %v213
    %v373 = vpack.c.bf16 %v221, %v215
    %v374 = vpack.c.bf16 %v332, %v326
    %v375 = vpack.c.bf16 %v334, %v328
    %v376 = vpack.c.bf16 %v231, %v225
    %v377 = vpack.c.bf16 %v233, %v227
    %v378 = vpack.c.bf16 %v344, %v338
    %v379 = vpack.c.bf16 %v346, %v340
    %v380 = vpack.c.bf16 %v243, %v237
    %v381 = vpack.c.bf16 %v245, %v239
    %v382 = vpack.c.bf16 %v356, %v350
    %v383 = vpack.c.bf16 %v358, %v352
    %v384 = vpack.c.bf16 %v255, %v249
    %v385 = vpack.c.bf16 %v257, %v251
    %v386 = vpack.c.bf16 %v368, %v362
    %v387 = vpack.c.bf16 %v370, %v364
    %v388 = vld [vmem:[#allocation7] sm:$0xf]
    %v390 = vlaneseq
    %v391 = vshrl.u32 %v390, 7
    %v392 = vsub.s32 0, %v391
    %v393 = vrot.slane %v388, %v392
    %v394 = vlaneseq
    %v395 = vshrl.u32 %v394, 7
    %v396 = vsub.s32 1, %v395
    %v397 = vrot.slane %v388, %v396
    %v398 = vlaneseq
    %v399 = vshrl.u32 %v398, 7
    %v400 = vsub.s32 2, %v399
    %v401 = vrot.slane %v388, %v400
    %v402 = vlaneseq
    %v403 = vshrl.u32 %v402, 7
    %v404 = vsub.s32 3, %v403
    %v405 = vrot.slane %v388, %v404
    %v418 = vunpack.c.l.b16 %v89
    %v419 = vunpack.c.l.b16 %v90
    %v420 = vunpack.c.l.b16 %v91
    %v421 = vunpack.c.l.b16 %v92
    %v422 = vunpack.c.l.b16 %v93
    %v423 = vunpack.c.l.b16 %v94
    %v424 = vunpack.c.l.b16 %v95
    %v425 = vunpack.c.l.b16 %v96
    %v426 = vpack.c.b16 %v419, %v418
    %v427 = vpack.c.b16 %v421, %v420
    %v428 = vpack.c.b16 %v423, %v422
    %v429 = vpack.c.b16 %v425, %v424
    %vm430 = vcmask 523264
    %v432 = vsel %vm430, %v426, 0
    %v435 = vsel %vm430, %v427, 0
    %v438 = vsel %vm430, %v428, 0
    %v441 = vsel %vm430, %v429, 0
    %443 = vmatprep.subr.bf16.mxu0 %v373
    %444 = vmatpush1.bf16.msra.mxu0 %v372
    %445 = vmatprep.subr.bf16.mxu0 %v377
    %446 = vmatpush1.bf16.msra.mxu0 %v376
    %447 = vmatprep.subr.bf16.mxu0 %v381
    %448 = vmatpush1.bf16.msra.mxu0 %v380
    %449 = vmatprep.subr.bf16.mxu0 %v385
    %450 = vmatpush1.bf16.msra.mxu0 %v384
    %451 = vmatprep.subr.bf16.mxu0 0
    %452 = vmatpush1.bf16.msra.mxu0 0
    %453 = vmatprep.subr.bf16.mxu0 0
    %454 = vmatpush1.bf16.msra.mxu0 0
    %455 = vmatprep.subr.bf16.mxu0 0
    %456 = vmatpush1.bf16.msra.mxu0 0
    %457 = vmatprep.subr.bf16.mxu0 0
    %458 = vmatpush1.bf16.msra.mxu0 0
    %459 = vmatprep.subr.bf16.mxu0 0
    %460 = vmatpush1.bf16.msra.mxu0 0
    %461 = vmatprep.subr.bf16.mxu0 0
    %462 = vmatpush1.bf16.msra.mxu0 0
    %463 = vmatprep.subr.bf16.mxu0 0
    %464 = vmatpush1.bf16.msra.mxu0 0
    %465 = vmatprep.subr.bf16.mxu0 0
    %466 = vmatpush1.bf16.msra.mxu0 0
    %467 = vmatprep.subr.bf16.mxu0 0
    %468 = vmatpush1.bf16.msra.mxu0 0
    %469 = vmatprep.subr.bf16.mxu0 0
    %470 = vmatpush1.bf16.msra.mxu0 0
    %471 = vmatprep.subr.bf16.mxu0 0
    %472 = vmatpush1.bf16.msra.mxu0 0
    %473 = vmatprep.subr.bf16.mxu0 0
    %474 = vmatpush1.bf16.msra.mxu0 0
    %475 = vmatprep.mubr.bf16.mxu0 0
    %476 = vmatmul.mubr.bf16.gmra.mrb[0].mxu0 %v432
    %v477 = vpop.f32.mrb[0].mxu0
    %v478 = vadd.f32 %v393, %v477
    %v479 = vpop.f32.mrb[0].mxu0
    %v480 = vadd.f32 %v397, %v479
    %v481 = vpop.f32.mrb[0].mxu0
    %v482 = vadd.f32 %v393, %v481
    %v483 = vpop.f32.mrb[0].mxu0
    %v484 = vadd.f32 %v397, %v483
    %485 = vmatprep.mubr.bf16.mxu0 0
    %486 = vmatmul.mubr.bf16.gmra.mrb[0].mxu0 %v435
    %v487 = vpop.f32.mrb[0].mxu0
    %v488 = vadd.f32 %v393, %v487
    %v489 = vpop.f32.mrb[0].mxu0
    %v490 = vadd.f32 %v397, %v489
    %v491 = vpop.f32.mrb[0].mxu0
    %v492 = vadd.f32 %v393, %v491
    %v493 = vpop.f32.mrb[0].mxu0
    %v494 = vadd.f32 %v397, %v493
    %495 = vmatprep.mubr.bf16.mxu0 0
    %496 = vmatmul.mubr.bf16.gmra.mrb[0].mxu0 %v438
    %v497 = vpop.f32.mrb[0].mxu0
    %v498 = vadd.f32 %v393, %v497
    %v499 = vpop.f32.mrb[0].mxu0
    %v500 = vadd.f32 %v397, %v499
    %v501 = vpop.f32.mrb[0].mxu0
    %v502 = vadd.f32 %v393, %v501
    %v503 = vpop.f32.mrb[0].mxu0
    %v504 = vadd.f32 %v397, %v503
    %505 = vmatprep.mubr.bf16.mxu0 0
    %506 = vmatmul.mubr.bf16.gmra.mrb[0].mxu0 %v441
    %v507 = vpop.f32.mrb[0].mxu0
    %v508 = vadd.f32 %v393, %v507
    %v509 = vpop.f32.mrb[0].mxu0
    %v510 = vadd.f32 %v397, %v509
    %v511 = vpop.f32.mrb[0].mxu0
    %v512 = vadd.f32 %v393, %v511
    %v513 = vpop.f32.mrb[0].mxu0
    %v514 = vadd.f32 %v397, %v513
    %515 = vdwg.mxu0
    %516 = vmatprep.subr.bf16.mxu0 %v375
    %517 = vmatpush1.bf16.msra.mxu0 %v374
    %518 = vmatprep.subr.bf16.mxu0 %v379
    %519 = vmatpush1.bf16.msra.mxu0 %v378
    %520 = vmatprep.subr.bf16.mxu0 %v383
    %521 = vmatpush1.bf16.msra.mxu0 %v382
    %522 = vmatprep.subr.bf16.mxu0 %v387
    %523 = vmatpush1.bf16.msra.mxu0 %v386
    %524 = vmatprep.subr.bf16.mxu0 0
    %525 = vmatpush1.bf16.msra.mxu0 0
    %526 = vmatprep.subr.bf16.mxu0 0
    %527 = vmatpush1.bf16.msra.mxu0 0
    %528 = vmatprep.subr.bf16.mxu0 0
    %529 = vmatpush1.bf16.msra.mxu0 0
    %530 = vmatprep.subr.bf16.mxu0 0
    %531 = vmatpush1.bf16.msra.mxu0 0
    %532 = vmatprep.subr.bf16.mxu0 0
    %533 = vmatpush1.bf16.msra.mxu0 0
    %534 = vmatprep.subr.bf16.mxu0 0
    %535 = vmatpush1.bf16.msra.mxu0 0
    %536 = vmatprep.subr.bf16.mxu0 0
    %537 = vmatpush1.bf16.msra.mxu0 0
    %538 = vmatprep.subr.bf16.mxu0 0
    %539 = vmatpush1.bf16.msra.mxu0 0
    %540 = vmatprep.subr.bf16.mxu0 0
    %541 = vmatpush1.bf16.msra.mxu0 0
    %542 = vmatprep.subr.bf16.mxu0 0
    %543 = vmatpush1.bf16.msra.mxu0 0
    %544 = vmatprep.subr.bf16.mxu0 0
    %545 = vmatpush1.bf16.msra.mxu0 0
    %546 = vmatprep.subr.bf16.mxu0 0
    %547 = vmatpush1.bf16.msra.mxu0 0
    %548 = vmatprep.mubr.bf16.mxu0 0
    %549 = vmatmul.mubr.bf16.gmra.mrb[0].mxu0 %v432
    %v550 = vpop.f32.mrb[0].mxu0
    %v551 = vadd.f32 %v401, %v550
    %v552 = vpop.f32.mrb[0].mxu0
    %v553 = vadd.f32 %v405, %v552
    %v554 = vpop.f32.mrb[0].mxu0
    %v555 = vadd.f32 %v401, %v554
    %v556 = vpop.f32.mrb[0].mxu0
    %v557 = vadd.f32 %v405, %v556
    %558 = vmatprep.mubr.bf16.mxu0 0
    %559 = vmatmul.mubr.bf16.gmra.mrb[0].mxu0 %v435
    %v560 = vpop.f32.mrb[0].mxu0
    %v561 = vadd.f32 %v401, %v560
    %v562 = vpop.f32.mrb[0].mxu0
    %v563 = vadd.f32 %v405, %v562
    %v564 = vpop.f32.mrb[0].mxu0
    %v565 = vadd.f32 %v401, %v564
    %v566 = vpop.f32.mrb[0].mxu0
    %v567 = vadd.f32 %v405, %v566
    %568 = vmatprep.mubr.bf16.mxu0 0
    %569 = vmatmul.mubr.bf16.gmra.mrb[0].mxu0 %v438
    %v570 = vpop.f32.mrb[0].mxu0
    %v571 = vadd.f32 %v401, %v570
    %v572 = vpop.f32.mrb[0].mxu0
    %v573 = vadd.f32 %v405, %v572
    %v574 = vpop.f32.mrb[0].mxu0
    %v575 = vadd.f32 %v401, %v574
    %v576 = vpop.f32.mrb[0].mxu0
    %v577 = vadd.f32 %v405, %v576
    %578 = vmatprep.mubr.bf16.mxu0 0
    %579 = vmatmul.mubr.bf16.gmra.mrb[0].mxu0 %v441
    %v580 = vpop.f32.mrb[0].mxu0
    %v581 = vadd.f32 %v401, %v580
    %v582 = vpop.f32.mrb[0].mxu0
    %v583 = vadd.f32 %v405, %v582
    %v584 = vpop.f32.mrb[0].mxu0
    %v585 = vadd.f32 %v401, %v584
    %v586 = vpop.f32.mrb[0].mxu0
    %v587 = vadd.f32 %v405, %v586
    %588 = vdwg.mxu0
    %v589 = vmax.f32 %v478, 0.0
    %v590 = vmax.f32 %v480, 0.0
    %v591 = vmax.f32 %v551, 0.0
    %v592 = vmax.f32 %v553, 0.0
    %v593 = vmax.f32 %v482, 0.0
    %v594 = vmax.f32 %v484, 0.0
    %v595 = vmax.f32 %v555, 0.0
    %v596 = vmax.f32 %v557, 0.0
    %v597 = vmax.f32 %v488, 0.0
    %v598 = vmax.f32 %v490, 0.0
    %v599 = vmax.f32 %v561, 0.0
    %v600 = vmax.f32 %v563, 0.0
    %v601 = vmax.f32 %v492, 0.0
    %v602 = vmax.f32 %v494, 0.0
    %v603 = vmax.f32 %v565, 0.0
    %v604 = vmax.f32 %v567, 0.0
    %v605 = vmax.f32 %v498, 0.0
    %v606 = vmax.f32 %v500, 0.0
    %v607 = vmax.f32 %v571, 0.0
    %v608 = vmax.f32 %v573, 0.0
    %v609 = vmax.f32 %v502, 0.0
    %v610 = vmax.f32 %v504, 0.0
    %v611 = vmax.f32 %v575, 0.0
    %v612 = vmax.f32 %v577, 0.0
    %v613 = vmax.f32 %v508, 0.0
    %v614 = vmax.f32 %v510, 0.0
    %v615 = vmax.f32 %v581, 0.0
    %v616 = vmax.f32 %v583, 0.0
    %v617 = vmax.f32 %v512, 0.0
    %v618 = vmax.f32 %v514, 0.0
    %v619 = vmax.f32 %v585, 0.0
    %v620 = vmax.f32 %v587, 0.0
    %v621 = vld [vmem:[#allocation8] sm:$0xff]
    %v622 = vld [vmem:[#allocation8 + $0x8] sm:$0xff]
    %v623 = vld [vmem:[#allocation8 + $0x10] sm:$0xff]
    %v624 = vld [vmem:[#allocation8 + $0x18] sm:$0xff]
    %v625 = vld [vmem:[#allocation8 + $0x20] sm:$0xff]
    %v626 = vld [vmem:[#allocation8 + $0x28] sm:$0xff]
    %v627 = vld [vmem:[#allocation8 + $0x30] sm:$0xff]
    %v628 = vld [vmem:[#allocation8 + $0x38] sm:$0xff]
    %v629 = vld [vmem:[#allocation8 + $0x40] sm:$0xff]
    %v630 = vld [vmem:[#allocation8 + $0x48] sm:$0xff]
    %v631 = vld [vmem:[#allocation8 + $0x50] sm:$0xff]
    %v632 = vld [vmem:[#allocation8 + $0x58] sm:$0xff]
    %v633 = vld [vmem:[#allocation8 + $0x60] sm:$0xff]
    %v634 = vld [vmem:[#allocation8 + $0x68] sm:$0xff]
    %v635 = vld [vmem:[#allocation8 + $0x70] sm:$0xff]
    %v636 = vld [vmem:[#allocation8 + $0x78] sm:$0xff]
    %v637 = vld [vmem:[#allocation8 + $0x80] sm:$0xff]
    %v638 = vld [vmem:[#allocation8 + $0x88] sm:$0xff]
    %v639 = vld [vmem:[#allocation8 + $0x90] sm:$0xff]
    %v640 = vld [vmem:[#allocation8 + $0x98] sm:$0xff]
    %v641 = vld [vmem:[#allocation8 + $0xa0] sm:$0xff]
    %v642 = vld [vmem:[#allocation8 + $0xa8] sm:$0xff]
    %v643 = vld [vmem:[#allocation8 + $0xb0] sm:$0xff]
    %v644 = vld [vmem:[#allocation8 + $0xb8] sm:$0xff]
    %v645 = vld [vmem:[#allocation8 + $0xc0] sm:$0xff]
    %v646 = vld [vmem:[#allocation8 + $0xc8] sm:$0xff]
    %v647 = vld [vmem:[#allocation8 + $0xd0] sm:$0xff]
    %v648 = vld [vmem:[#allocation8 + $0xd8] sm:$0xff]
    %v649 = vld [vmem:[#allocation8 + $0xe0] sm:$0xff]
    %v650 = vld [vmem:[#allocation8 + $0xe8] sm:$0xff]
    %v651 = vld [vmem:[#allocation8 + $0xf0] sm:$0xff]
    %v652 = vld [vmem:[#allocation8 + $0xf8] sm:$0xff]
    %v653 = vld [vmem:[#allocation8 + $0x100] sm:$0xff]
    %v654 = vld [vmem:[#allocation8 + $0x108] sm:$0xff]
    %v655 = vld [vmem:[#allocation8 + $0x110] sm:$0xff]
    %v656 = vld [vmem:[#allocation8 + $0x118] sm:$0xff]
    %v657 = vld [vmem:[#allocation8 + $0x120] sm:$0xff]
    %v658 = vld [vmem:[#allocation8 + $0x128] sm:$0xff]
    %v659 = vld [vmem:[#allocation8 + $0x130] sm:$0xff]
    %v660 = vld [vmem:[#allocation8 + $0x138] sm:$0xff]
    %v661 = vld [vmem:[#allocation8 + $0x140] sm:$0xff]
    %v662 = vld [vmem:[#allocation8 + $0x148] sm:$0xff]
    %v663 = vld [vmem:[#allocation8 + $0x150] sm:$0xff]
    %v664 = vld [vmem:[#allocation8 + $0x158] sm:$0xff]
    %v665 = vld [vmem:[#allocation8 + $0x160] sm:$0xff]
    %v666 = vld [vmem:[#allocation8 + $0x168] sm:$0xff]
    %v667 = vld [vmem:[#allocation8 + $0x170] sm:$0xff]
    %v668 = vld [vmem:[#allocation8 + $0x178] sm:$0xff]
    %v669 = vld [vmem:[#allocation8 + $0x180] sm:$0xff]
    %v670 = vld [vmem:[#allocation8 + $0x188] sm:$0xff]
    %v671 = vld [vmem:[#allocation8 + $0x190] sm:$0xff]
    %v672 = vld [vmem:[#allocation8 + $0x198] sm:$0xff]
    %v673 = vld [vmem:[#allocation8 + $0x1a0] sm:$0xff]
    %v674 = vld [vmem:[#allocation8 + $0x1a8] sm:$0xff]
    %v675 = vld [vmem:[#allocation8 + $0x1b0] sm:$0xff]
    %v676 = vld [vmem:[#allocation8 + $0x1b8] sm:$0xff]
    %v677 = vld [vmem:[#allocation8 + $0x1c0] sm:$0xff]
    %v678 = vld [vmem:[#allocation8 + $0x1c8] sm:$0xff]
    %v679 = vld [vmem:[#allocation8 + $0x1d0] sm:$0xff]
    %v680 = vld [vmem:[#allocation8 + $0x1d8] sm:$0xff]
    %v681 = vld [vmem:[#allocation8 + $0x1e0] sm:$0xff]
    %v682 = vld [vmem:[#allocation8 + $0x1e8] sm:$0xff]
    %v683 = vld [vmem:[#allocation8 + $0x1f0] sm:$0xff]
    %v684 = vld [vmem:[#allocation8 + $0x1f8] sm:$0xff]
    %v685 = vld [vmem:[#allocation8 + $0x200] sm:$0xff]
    %v686 = vld [vmem:[#allocation8 + $0x208] sm:$0xff]
    %v687 = vld [vmem:[#allocation8 + $0x210] sm:$0xff]
    %v688 = vld [vmem:[#allocation8 + $0x218] sm:$0xff]
    %v689 = vld [vmem:[#allocation8 + $0x220] sm:$0xff]
    %v690 = vld [vmem:[#allocation8 + $0x228] sm:$0xff]
    %v691 = vld [vmem:[#allocation8 + $0x230] sm:$0xff]
    %v692 = vld [vmem:[#allocation8 + $0x238] sm:$0xff]
    %v693 = vld [vmem:[#allocation8 + $0x240] sm:$0xff]
    %v694 = vld [vmem:[#allocation8 + $0x248] sm:$0xff]
    %v695 = vld [vmem:[#allocation8 + $0x250] sm:$0xff]
    %v696 = vld [vmem:[#allocation8 + $0x258] sm:$0xff]
    %v697 = vld [vmem:[#allocation8 + $0x260] sm:$0xff]
    %v698 = vld [vmem:[#allocation8 + $0x268] sm:$0xff]
    %v699 = vld [vmem:[#allocation8 + $0x270] sm:$0xff]
    %v700 = vld [vmem:[#allocation8 + $0x278] sm:$0xff]
    %v701 = vld [vmem:[#allocation8 + $0x280] sm:$0xff]
    %v702 = vld [vmem:[#allocation8 + $0x288] sm:$0xff]
    %v703 = vld [vmem:[#allocation8 + $0x290] sm:$0xff]
    %v704 = vld [vmem:[#allocation8 + $0x298] sm:$0xff]
    %v705 = vld [vmem:[#allocation8 + $0x2a0] sm:$0xff]
    %v706 = vld [vmem:[#allocation8 + $0x2a8] sm:$0xff]
    %v707 = vld [vmem:[#allocation8 + $0x2b0] sm:$0xff]
    %v708 = vld [vmem:[#allocation8 + $0x2b8] sm:$0xff]
    %v709 = vld [vmem:[#allocation8 + $0x2c0] sm:$0xff]
    %v710 = vld [vmem:[#allocation8 + $0x2c8] sm:$0xff]
    %v711 = vld [vmem:[#allocation8 + $0x2d0] sm:$0xff]
    %v712 = vld [vmem:[#allocation8 + $0x2d8] sm:$0xff]
    %v713 = vld [vmem:[#allocation8 + $0x2e0] sm:$0xff]
    %v714 = vld [vmem:[#allocation8 + $0x2e8] sm:$0xff]
    %v715 = vld [vmem:[#allocation8 + $0x2f0] sm:$0xff]
    %v716 = vld [vmem:[#allocation8 + $0x2f8] sm:$0xff]
    %v717 = vld [vmem:[#allocation8 + $0x300] sm:$0xff]
    %v718 = vld [vmem:[#allocation8 + $0x308] sm:$0xff]
    %v719 = vld [vmem:[#allocation8 + $0x310] sm:$0xff]
    %v720 = vld [vmem:[#allocation8 + $0x318] sm:$0xff]
    %v721 = vld [vmem:[#allocation8 + $0x320] sm:$0xff]
    %v722 = vld [vmem:[#allocation8 + $0x328] sm:$0xff]
    %v723 = vld [vmem:[#allocation8 + $0x330] sm:$0xff]
    %v724 = vld [vmem:[#allocation8 + $0x338] sm:$0xff]
    %v725 = vld [vmem:[#allocation8 + $0x340] sm:$0xff]
    %v726 = vld [vmem:[#allocation8 + $0x348] sm:$0xff]
    %v727 = vld [vmem:[#allocation8 + $0x350] sm:$0xff]
    %v728 = vld [vmem:[#allocation8 + $0x358] sm:$0xff]
    %v729 = vld [vmem:[#allocation8 + $0x360] sm:$0xff]
    %v730 = vld [vmem:[#allocation8 + $0x368] sm:$0xff]
    %v731 = vld [vmem:[#allocation8 + $0x370] sm:$0xff]
    %v732 = vld [vmem:[#allocation8 + $0x378] sm:$0xff]
    %v733 = vld [vmem:[#allocation8 + $0x380] sm:$0xff]
    %v734 = vld [vmem:[#allocation8 + $0x388] sm:$0xff]
    %v735 = vld [vmem:[#allocation8 + $0x390] sm:$0xff]
    %v736 = vld [vmem:[#allocation8 + $0x398] sm:$0xff]
    %v737 = vld [vmem:[#allocation8 + $0x3a0] sm:$0xff]
    %v738 = vld [vmem:[#allocation8 + $0x3a8] sm:$0xff]
    %v739 = vld [vmem:[#allocation8 + $0x3b0] sm:$0xff]
    %v740 = vld [vmem:[#allocation8 + $0x3b8] sm:$0xff]
    %v741 = vld [vmem:[#allocation8 + $0x3c0] sm:$0xff]
    %v742 = vld [vmem:[#allocation8 + $0x3c8] sm:$0xff]
    %v743 = vld [vmem:[#allocation8 + $0x3d0] sm:$0xff]
    %v744 = vld [vmem:[#allocation8 + $0x3d8] sm:$0xff]
    %v745 = vld [vmem:[#allocation8 + $0x3e0] sm:$0xff]
    %v746 = vld [vmem:[#allocation8 + $0x3e8] sm:$0xff]
    %v747 = vld [vmem:[#allocation8 + $0x3f0] sm:$0xff]
    %v748 = vld [vmem:[#allocation8 + $0x3f8] sm:$0xff]
    %v749 = vld [vmem:[#allocation8 + $0x400] sm:$0xff]
    %v750 = vld [vmem:[#allocation8 + $0x408] sm:$0xff]
    %v751 = vld [vmem:[#allocation8 + $0x410] sm:$0xff]
    %v752 = vld [vmem:[#allocation8 + $0x418] sm:$0xff]
    %v753 = vld [vmem:[#allocation8 + $0x420] sm:$0xff]
    %v754 = vld [vmem:[#allocation8 + $0x428] sm:$0xff]
    %v755 = vld [vmem:[#allocation8 + $0x430] sm:$0xff]
    %v756 = vld [vmem:[#allocation8 + $0x438] sm:$0xff]
    %v757 = vld [vmem:[#allocation8 + $0x440] sm:$0xff]
    %v758 = vld [vmem:[#allocation8 + $0x448] sm:$0xff]
    %v759 = vld [vmem:[#allocation8 + $0x450] sm:$0xff]
    %v760 = vld [vmem:[#allocation8 + $0x458] sm:$0xff]
    %v761 = vld [vmem:[#allocation8 + $0x460] sm:$0xff]
    %v762 = vld [vmem:[#allocation8 + $0x468] sm:$0xff]
    %v763 = vld [vmem:[#allocation8 + $0x470] sm:$0xff]
    %v764 = vld [vmem:[#allocation8 + $0x478] sm:$0xff]
    %v765 = vld [vmem:[#allocation8 + $0x480] sm:$0xff]
    %v766 = vld [vmem:[#allocation8 + $0x488] sm:$0xff]
    %v767 = vld [vmem:[#allocation8 + $0x490] sm:$0xff]
    %v768 = vld [vmem:[#allocation8 + $0x498] sm:$0xff]
    %v769 = vld [vmem:[#allocation8 + $0x4a0] sm:$0xff]
    %v770 = vld [vmem:[#allocation8 + $0x4a8] sm:$0xff]
    %v771 = vld [vmem:[#allocation8 + $0x4b0] sm:$0xff]
    %v772 = vld [vmem:[#allocation8 + $0x4b8] sm:$0xff]
    %v773 = vld [vmem:[#allocation8 + $0x4c0] sm:$0xff]
    %v774 = vld [vmem:[#allocation8 + $0x4c8] sm:$0xff]
    %v775 = vld [vmem:[#allocation8 + $0x4d0] sm:$0xff]
    %v776 = vld [vmem:[#allocation8 + $0x4d8] sm:$0xff]
    %v777 = vld [vmem:[#allocation8 + $0x4e0] sm:$0xff]
    %v778 = vld [vmem:[#allocation8 + $0x4e8] sm:$0xff]
    %v779 = vld [vmem:[#allocation8 + $0x4f0] sm:$0xff]
    %v780 = vld [vmem:[#allocation8 + $0x4f8] sm:$0xff]
    %v781 = vld [vmem:[#allocation8 + $0x500] sm:$0xff]
    %v782 = vld [vmem:[#allocation8 + $0x508] sm:$0xff]
    %v783 = vld [vmem:[#allocation8 + $0x510] sm:$0xff]
    %v784 = vld [vmem:[#allocation8 + $0x518] sm:$0xff]
    %v785 = vld [vmem:[#allocation8 + $0x520] sm:$0xff]
    %v786 = vld [vmem:[#allocation8 + $0x528] sm:$0xff]
    %v787 = vld [vmem:[#allocation8 + $0x530] sm:$0xff]
    %v788 = vld [vmem:[#allocation8 + $0x538] sm:$0xff]
    %v789 = vld [vmem:[#allocation8 + $0x540] sm:$0xff]
    %v790 = vld [vmem:[#allocation8 + $0x548] sm:$0xff]
    %v791 = vld [vmem:[#allocation8 + $0x550] sm:$0xff]
    %v792 = vld [vmem:[#allocation8 + $0x558] sm:$0xff]
    %v793 = vld [vmem:[#allocation8 + $0x560] sm:$0xff]
    %v794 = vld [vmem:[#allocation8 + $0x568] sm:$0xff]
    %v795 = vld [vmem:[#allocation8 + $0x570] sm:$0xff]
    %v796 = vld [vmem:[#allocation8 + $0x578] sm:$0xff]
    %v797 = vld [vmem:[#allocation8 + $0x580] sm:$0xff]
    %v798 = vld [vmem:[#allocation8 + $0x588] sm:$0xff]
    %v799 = vld [vmem:[#allocation8 + $0x590] sm:$0xff]
    %v800 = vld [vmem:[#allocation8 + $0x598] sm:$0xff]
    %v801 = vld [vmem:[#allocation8 + $0x5a0] sm:$0xff]
    %v802 = vld [vmem:[#allocation8 + $0x5a8] sm:$0xff]
    %v803 = vld [vmem:[#allocation8 + $0x5b0] sm:$0xff]
    %v804 = vld [vmem:[#allocation8 + $0x5b8] sm:$0xff]
    %v805 = vld [vmem:[#allocation8 + $0x5c0] sm:$0xff]
    %v806 = vld [vmem:[#allocation8 + $0x5c8] sm:$0xff]
    %v807 = vld [vmem:[#allocation8 + $0x5d0] sm:$0xff]
    %v808 = vld [vmem:[#allocation8 + $0x5d8] sm:$0xff]
    %v809 = vld [vmem:[#allocation8 + $0x5e0] sm:$0xff]
    %v810 = vld [vmem:[#allocation8 + $0x5e8] sm:$0xff]
    %v811 = vld [vmem:[#allocation8 + $0x5f0] sm:$0xff]
    %v812 = vld [vmem:[#allocation8 + $0x5f8] sm:$0xff]
    %v813 = vld [vmem:[#allocation8 + $0x600] sm:$0xff]
    %v814 = vld [vmem:[#allocation8 + $0x608] sm:$0xff]
    %v815 = vld [vmem:[#allocation8 + $0x610] sm:$0xff]
    %v816 = vld [vmem:[#allocation8 + $0x618] sm:$0xff]
    %v817 = vld [vmem:[#allocation8 + $0x620] sm:$0xff]
    %v818 = vld [vmem:[#allocation8 + $0x628] sm:$0xff]
    %v819 = vld [vmem:[#allocation8 + $0x630] sm:$0xff]
    %v820 = vld [vmem:[#allocation8 + $0x638] sm:$0xff]
    %v821 = vld [vmem:[#allocation8 + $0x640] sm:$0xff]
    %v822 = vld [vmem:[#allocation8 + $0x648] sm:$0xff]
    %v823 = vld [vmem:[#allocation8 + $0x650] sm:$0xff]
    %v824 = vld [vmem:[#allocation8 + $0x658] sm:$0xff]
    %v825 = vld [vmem:[#allocation8 + $0x660] sm:$0xff]
    %v826 = vld [vmem:[#allocation8 + $0x668] sm:$0xff]
    %v827 = vld [vmem:[#allocation8 + $0x670] sm:$0xff]
    %v828 = vld [vmem:[#allocation8 + $0x678] sm:$0xff]
    %v829 = vld [vmem:[#allocation8 + $0x680] sm:$0xff]
    %v830 = vld [vmem:[#allocation8 + $0x688] sm:$0xff]
    %v831 = vld [vmem:[#allocation8 + $0x690] sm:$0xff]
    %v832 = vld [vmem:[#allocation8 + $0x698] sm:$0xff]
    %v833 = vld [vmem:[#allocation8 + $0x6a0] sm:$0xff]
    %v834 = vld [vmem:[#allocation8 + $0x6a8] sm:$0xff]
    %v835 = vld [vmem:[#allocation8 + $0x6b0] sm:$0xff]
    %v836 = vld [vmem:[#allocation8 + $0x6b8] sm:$0xff]
    %v837 = vld [vmem:[#allocation8 + $0x6c0] sm:$0xff]
    %v838 = vld [vmem:[#allocation8 + $0x6c8] sm:$0xff]
    %v839 = vld [vmem:[#allocation8 + $0x6d0] sm:$0xff]
    %v840 = vld [vmem:[#allocation8 + $0x6d8] sm:$0xff]
    %v841 = vld [vmem:[#allocation8 + $0x6e0] sm:$0xff]
    %v842 = vld [vmem:[#allocation8 + $0x6e8] sm:$0xff]
    %v843 = vld [vmem:[#allocation8 + $0x6f0] sm:$0xff]
    %v844 = vld [vmem:[#allocation8 + $0x6f8] sm:$0xff]
    %v845 = vld [vmem:[#allocation8 + $0x700] sm:$0xff]
    %v846 = vld [vmem:[#allocation8 + $0x708] sm:$0xff]
    %v847 = vld [vmem:[#allocation8 + $0x710] sm:$0xff]
    %v848 = vld [vmem:[#allocation8 + $0x718] sm:$0xff]
    %v849 = vld [vmem:[#allocation8 + $0x720] sm:$0xff]
    %v850 = vld [vmem:[#allocation8 + $0x728] sm:$0xff]
    %v851 = vld [vmem:[#allocation8 + $0x730] sm:$0xff]
    %v852 = vld [vmem:[#allocation8 + $0x738] sm:$0xff]
    %v853 = vld [vmem:[#allocation8 + $0x740] sm:$0xff]
    %v854 = vld [vmem:[#allocation8 + $0x748] sm:$0xff]
    %v855 = vld [vmem:[#allocation8 + $0x750] sm:$0xff]
    %v856 = vld [vmem:[#allocation8 + $0x758] sm:$0xff]
    %v857 = vld [vmem:[#allocation8 + $0x760] sm:$0xff]
    %v858 = vld [vmem:[#allocation8 + $0x768] sm:$0xff]
    %v859 = vld [vmem:[#allocation8 + $0x770] sm:$0xff]
    %v860 = vld [vmem:[#allocation8 + $0x778] sm:$0xff]
    %v861 = vld [vmem:[#allocation8 + $0x780] sm:$0xff]
    %v862 = vld [vmem:[#allocation8 + $0x788] sm:$0xff]
    %v863 = vld [vmem:[#allocation8 + $0x790] sm:$0xff]
    %v864 = vld [vmem:[#allocation8 + $0x798] sm:$0xff]
    %v865 = vld [vmem:[#allocation8 + $0x7a0] sm:$0xff]
    %v866 = vld [vmem:[#allocation8 + $0x7a8] sm:$0xff]
    %v867 = vld [vmem:[#allocation8 + $0x7b0] sm:$0xff]
    %v868 = vld [vmem:[#allocation8 + $0x7b8] sm:$0xff]
    %v869 = vld [vmem:[#allocation8 + $0x7c0] sm:$0xff]
    %v870 = vld [vmem:[#allocation8 + $0x7c8] sm:$0xff]
    %v871 = vld [vmem:[#allocation8 + $0x7d0] sm:$0xff]
    %v872 = vld [vmem:[#allocation8 + $0x7d8] sm:$0xff]
    %v873 = vld [vmem:[#allocation8 + $0x7e0] sm:$0xff]
    %v874 = vld [vmem:[#allocation8 + $0x7e8] sm:$0xff]
    %v875 = vld [vmem:[#allocation8 + $0x7f0] sm:$0xff]
    %v876 = vld [vmem:[#allocation8 + $0x7f8] sm:$0xff]
    %v877 = vld [vmem:[#allocation8 + $0x800] sm:$0xff]
    %v878 = vld [vmem:[#allocation8 + $0x808] sm:$0xff]
    %v879 = vld [vmem:[#allocation8 + $0x810] sm:$0xff]
    %v880 = vld [vmem:[#allocation8 + $0x818] sm:$0xff]
    %v881 = vld [vmem:[#allocation8 + $0x820] sm:$0xff]
    %v882 = vld [vmem:[#allocation8 + $0x828] sm:$0xff]
    %v883 = vld [vmem:[#allocation8 + $0x830] sm:$0xff]
    %v884 = vld [vmem:[#allocation8 + $0x838] sm:$0xff]
    %v885 = vld [vmem:[#allocation8 + $0x840] sm:$0xff]
    %v886 = vld [vmem:[#allocation8 + $0x848] sm:$0xff]
    %v887 = vld [vmem:[#allocation8 + $0x850] sm:$0xff]
    %v888 = vld [vmem:[#allocation8 + $0x858] sm:$0xff]
    %v889 = vld [vmem:[#allocation8 + $0x860] sm:$0xff]
    %v890 = vld [vmem:[#allocation8 + $0x868] sm:$0xff]
    %v891 = vld [vmem:[#allocation8 + $0x870] sm:$0xff]
    %v892 = vld [vmem:[#allocation8 + $0x878] sm:$0xff]
    %v893 = vld [vmem:[#allocation8 + $0x880] sm:$0xff]
    %v894 = vld [vmem:[#allocation8 + $0x888] sm:$0xff]
    %v895 = vld [vmem:[#allocation8 + $0x890] sm:$0xff]
    %v896 = vld [vmem:[#allocation8 + $0x898] sm:$0xff]
    %v897 = vld [vmem:[#allocation8 + $0x8a0] sm:$0xff]
    %v898 = vld [vmem:[#allocation8 + $0x8a8] sm:$0xff]
    %v899 = vld [vmem:[#allocation8 + $0x8b0] sm:$0xff]
    %v900 = vld [vmem:[#allocation8 + $0x8b8] sm:$0xff]
    %v901 = vld [vmem:[#allocation8 + $0x8c0] sm:$0xff]
    %v902 = vld [vmem:[#allocation8 + $0x8c8] sm:$0xff]
    %v903 = vld [vmem:[#allocation8 + $0x8d0] sm:$0xff]
    %v904 = vld [vmem:[#allocation8 + $0x8d8] sm:$0xff]
    %v905 = vld [vmem:[#allocation8 + $0x8e0] sm:$0xff]
    %v906 = vld [vmem:[#allocation8 + $0x8e8] sm:$0xff]
    %v907 = vld [vmem:[#allocation8 + $0x8f0] sm:$0xff]
    %v908 = vld [vmem:[#allocation8 + $0x8f8] sm:$0xff]
    %v909 = vld [vmem:[#allocation8 + $0x900] sm:$0xff]
    %v910 = vld [vmem:[#allocation8 + $0x908] sm:$0xff]
    %v911 = vld [vmem:[#allocation8 + $0x910] sm:$0xff]
    %v912 = vld [vmem:[#allocation8 + $0x918] sm:$0xff]
    %v913 = vld [vmem:[#allocation8 + $0x920] sm:$0xff]
    %v914 = vld [vmem:[#allocation8 + $0x928] sm:$0xff]
    %v915 = vld [vmem:[#allocation8 + $0x930] sm:$0xff]
    %v916 = vld [vmem:[#allocation8 + $0x938] sm:$0xff]
    %v917 = vld [vmem:[#allocation8 + $0x940] sm:$0xff]
    %v918 = vld [vmem:[#allocation8 + $0x948] sm:$0xff]
    %v919 = vld [vmem:[#allocation8 + $0x950] sm:$0xff]
    %v920 = vld [vmem:[#allocation8 + $0x958] sm:$0xff]
    %v921 = vld [vmem:[#allocation8 + $0x960] sm:$0xff]
    %v922 = vld [vmem:[#allocation8 + $0x968] sm:$0xff]
    %v923 = vld [vmem:[#allocation8 + $0x970] sm:$0xff]
    %v924 = vld [vmem:[#allocation8 + $0x978] sm:$0xff]
    %v925 = vld [vmem:[#allocation8 + $0x980] sm:$0xff]
    %v926 = vld [vmem:[#allocation8 + $0x988] sm:$0xff]
    %v927 = vld [vmem:[#allocation8 + $0x990] sm:$0xff]
    %v928 = vld [vmem:[#allocation8 + $0x998] sm:$0xff]
    %v929 = vld [vmem:[#allocation8 + $0x9a0] sm:$0xff]
    %v930 = vld [vmem:[#allocation8 + $0x9a8] sm:$0xff]
    %v931 = vld [vmem:[#allocation8 + $0x9b0] sm:$0xff]
    %v932 = vld [vmem:[#allocation8 + $0x9b8] sm:$0xff]
    %v933 = vld [vmem:[#allocation8 + $0x9c0] sm:$0xff]
    %v934 = vld [vmem:[#allocation8 + $0x9c8] sm:$0xff]
    %v935 = vld [vmem:[#allocation8 + $0x9d0] sm:$0xff]
    %v936 = vld [vmem:[#allocation8 + $0x9d8] sm:$0xff]
    %v937 = vld [vmem:[#allocation8 + $0x9e0] sm:$0xff]
    %v938 = vld [vmem:[#allocation8 + $0x9e8] sm:$0xff]
    %v939 = vld [vmem:[#allocation8 + $0x9f0] sm:$0xff]
    %v940 = vld [vmem:[#allocation8 + $0x9f8] sm:$0xff]
    %v941 = vld [vmem:[#allocation8 + $0xa00] sm:$0xff]
    %v942 = vld [vmem:[#allocation8 + $0xa08] sm:$0xff]
    %v943 = vld [vmem:[#allocation8 + $0xa10] sm:$0xff]
    %v944 = vld [vmem:[#allocation8 + $0xa18] sm:$0xff]
    %v945 = vld [vmem:[#allocation8 + $0xa20] sm:$0xff]
    %v946 = vld [vmem:[#allocation8 + $0xa28] sm:$0xff]
    %v947 = vld [vmem:[#allocation8 + $0xa30] sm:$0xff]
    %v948 = vld [vmem:[#allocation8 + $0xa38] sm:$0xff]
    %v949 = vld [vmem:[#allocation8 + $0xa40] sm:$0xff]
    %v950 = vld [vmem:[#allocation8 + $0xa48] sm:$0xff]
    %v951 = vld [vmem:[#allocation8 + $0xa50] sm:$0xff]
    %v952 = vld [vmem:[#allocation8 + $0xa58] sm:$0xff]
    %v953 = vld [vmem:[#allocation8 + $0xa60] sm:$0xff]
    %v954 = vld [vmem:[#allocation8 + $0xa68] sm:$0xff]
    %v955 = vld [vmem:[#allocation8 + $0xa70] sm:$0xff]
    %v956 = vld [vmem:[#allocation8 + $0xa78] sm:$0xff]
    %v957 = vld [vmem:[#allocation8 + $0xa80] sm:$0xff]
    %v958 = vld [vmem:[#allocation8 + $0xa88] sm:$0xff]
    %v959 = vld [vmem:[#allocation8 + $0xa90] sm:$0xff]
    %v960 = vld [vmem:[#allocation8 + $0xa98] sm:$0xff]
    %v961 = vld [vmem:[#allocation8 + $0xaa0] sm:$0xff]
    %v962 = vld [vmem:[#allocation8 + $0xaa8] sm:$0xff]
    %v963 = vld [vmem:[#allocation8 + $0xab0] sm:$0xff]
    %v964 = vld [vmem:[#allocation8 + $0xab8] sm:$0xff]
    %v965 = vld [vmem:[#allocation8 + $0xac0] sm:$0xff]
    %v966 = vld [vmem:[#allocation8 + $0xac8] sm:$0xff]
    %v967 = vld [vmem:[#allocation8 + $0xad0] sm:$0xff]
    %v968 = vld [vmem:[#allocation8 + $0xad8] sm:$0xff]
    %v969 = vld [vmem:[#allocation8 + $0xae0] sm:$0xff]
    %v970 = vld [vmem:[#allocation8 + $0xae8] sm:$0xff]
    %v971 = vld [vmem:[#allocation8 + $0xaf0] sm:$0xff]
    %v972 = vld [vmem:[#allocation8 + $0xaf8] sm:$0xff]
    %v973 = vld [vmem:[#allocation8 + $0xb00] sm:$0xff]
    %v974 = vld [vmem:[#allocation8 + $0xb08] sm:$0xff]
    %v975 = vld [vmem:[#allocation8 + $0xb10] sm:$0xff]
    %v976 = vld [vmem:[#allocation8 + $0xb18] sm:$0xff]
    %v977 = vld [vmem:[#allocation8 + $0xb20] sm:$0xff]
    %v978 = vld [vmem:[#allocation8 + $0xb28] sm:$0xff]
    %v979 = vld [vmem:[#allocation8 + $0xb30] sm:$0xff]
    %v980 = vld [vmem:[#allocation8 + $0xb38] sm:$0xff]
    %v981 = vld [vmem:[#allocation8 + $0xb40] sm:$0xff]
    %v982 = vld [vmem:[#allocation8 + $0xb48] sm:$0xff]
    %v983 = vld [vmem:[#allocation8 + $0xb50] sm:$0xff]
    %v984 = vld [vmem:[#allocation8 + $0xb58] sm:$0xff]
    %v985 = vld [vmem:[#allocation8 + $0xb60] sm:$0xff]
    %v986 = vld [vmem:[#allocation8 + $0xb68] sm:$0xff]
    %v987 = vld [vmem:[#allocation8 + $0xb70] sm:$0xff]
    %v988 = vld [vmem:[#allocation8 + $0xb78] sm:$0xff]
    %v989 = vld [vmem:[#allocation8 + $0xb80] sm:$0xff]
    %v990 = vld [vmem:[#allocation8 + $0xb88] sm:$0xff]
    %v991 = vld [vmem:[#allocation8 + $0xb90] sm:$0xff]
    %v992 = vld [vmem:[#allocation8 + $0xb98] sm:$0xff]
    %v993 = vld [vmem:[#allocation8 + $0xba0] sm:$0xff]
    %v994 = vld [vmem:[#allocation8 + $0xba8] sm:$0xff]
    %v995 = vld [vmem:[#allocation8 + $0xbb0] sm:$0xff]
    %v996 = vld [vmem:[#allocation8 + $0xbb8] sm:$0xff]
    %v997 = vld [vmem:[#allocation8 + $0xbc0] sm:$0xff]
    %v998 = vld [vmem:[#allocation8 + $0xbc8] sm:$0xff]
    %v999 = vld [vmem:[#allocation8 + $0xbd0] sm:$0xff]
    %v1000 = vld [vmem:[#allocation8 + $0xbd8] sm:$0xff]
    %v1001 = vld [vmem:[#allocation8 + $0xbe0] sm:$0xff]
    %v1002 = vld [vmem:[#allocation8 + $0xbe8] sm:$0xff]
    %v1003 = vld [vmem:[#allocation8 + $0xbf0] sm:$0xff]
    %v1004 = vld [vmem:[#allocation8 + $0xbf8] sm:$0xff]
    %v1005 = vld [vmem:[#allocation8 + $0xc00] sm:$0xff]
    %v1006 = vld [vmem:[#allocation8 + $0xc08] sm:$0xff]
    %v1007 = vld [vmem:[#allocation8 + $0xc10] sm:$0xff]
    %v1008 = vld [vmem:[#allocation8 + $0xc18] sm:$0xff]
    %v1009 = vld [vmem:[#allocation8 + $0xc20] sm:$0xff]
    %v1010 = vld [vmem:[#allocation8 + $0xc28] sm:$0xff]
    %v1011 = vld [vmem:[#allocation8 + $0xc30] sm:$0xff]
    %v1012 = vld [vmem:[#allocation8 + $0xc38] sm:$0xff]
    %v1013 = vld [vmem:[#allocation8 + $0xc40] sm:$0xff]
    %v1014 = vld [vmem:[#allocation8 + $0xc48] sm:$0xff]
    %v1015 = vld [vmem:[#allocation8 + $0xc50] sm:$0xff]
    %v1016 = vld [vmem:[#allocation8 + $0xc58] sm:$0xff]
    %v1017 = vld [vmem:[#allocation8 + $0xc60] sm:$0xff]
    %v1018 = vld [vmem:[#allocation8 + $0xc68] sm:$0xff]
    %v1019 = vld [vmem:[#allocation8 + $0xc70] sm:$0xff]
    %v1020 = vld [vmem:[#allocation8 + $0xc78] sm:$0xff]
    %v1021 = vld [vmem:[#allocation8 + $0xc80] sm:$0xff]
    %v1022 = vld [vmem:[#allocation8 + $0xc88] sm:$0xff]
    %v1023 = vld [vmem:[#allocation8 + $0xc90] sm:$0xff]
    %v1024 = vld [vmem:[#allocation8 + $0xc98] sm:$0xff]
    %v1025 = vld [vmem:[#allocation8 + $0xca0] sm:$0xff]
    %v1026 = vld [vmem:[#allocation8 + $0xca8] sm:$0xff]
    %v1027 = vld [vmem:[#allocation8 + $0xcb0] sm:$0xff]
    %v1028 = vld [vmem:[#allocation8 + $0xcb8] sm:$0xff]
    %v1029 = vld [vmem:[#allocation8 + $0xcc0] sm:$0xff]
    %v1030 = vld [vmem:[#allocation8 + $0xcc8] sm:$0xff]
    %v1031 = vld [vmem:[#allocation8 + $0xcd0] sm:$0xff]
    %v1032 = vld [vmem:[#allocation8 + $0xcd8] sm:$0xff]
    %v1033 = vld [vmem:[#allocation8 + $0xce0] sm:$0xff]
    %v1034 = vld [vmem:[#allocation8 + $0xce8] sm:$0xff]
    %v1035 = vld [vmem:[#allocation8 + $0xcf0] sm:$0xff]
    %v1036 = vld [vmem:[#allocation8 + $0xcf8] sm:$0xff]
    %v1037 = vld [vmem:[#allocation8 + $0xd00] sm:$0xff]
    %v1038 = vld [vmem:[#allocation8 + $0xd08] sm:$0xff]
    %v1039 = vld [vmem:[#allocation8 + $0xd10] sm:$0xff]
    %v1040 = vld [vmem:[#allocation8 + $0xd18] sm:$0xff]
    %v1041 = vld [vmem:[#allocation8 + $0xd20] sm:$0xff]
    %v1042 = vld [vmem:[#allocation8 + $0xd28] sm:$0xff]
    %v1043 = vld [vmem:[#allocation8 + $0xd30] sm:$0xff]
    %v1044 = vld [vmem:[#allocation8 + $0xd38] sm:$0xff]
    %v1045 = vld [vmem:[#allocation8 + $0xd40] sm:$0xff]
    %v1046 = vld [vmem:[#allocation8 + $0xd48] sm:$0xff]
    %v1047 = vld [vmem:[#allocation8 + $0xd50] sm:$0xff]
    %v1048 = vld [vmem:[#allocation8 + $0xd58] sm:$0xff]
    %v1049 = vld [vmem:[#allocation8 + $0xd60] sm:$0xff]
    %v1050 = vld [vmem:[#allocation8 + $0xd68] sm:$0xff]
    %v1051 = vld [vmem:[#allocation8 + $0xd70] sm:$0xff]
    %v1052 = vld [vmem:[#allocation8 + $0xd78] sm:$0xff]
    %v1053 = vld [vmem:[#allocation8 + $0xd80] sm:$0xff]
    %v1054 = vld [vmem:[#allocation8 + $0xd88] sm:$0xff]
    %v1055 = vld [vmem:[#allocation8 + $0xd90] sm:$0xff]
    %v1056 = vld [vmem:[#allocation8 + $0xd98] sm:$0xff]
    %v1057 = vld [vmem:[#allocation8 + $0xda0] sm:$0xff]
    %v1058 = vld [vmem:[#allocation8 + $0xda8] sm:$0xff]
    %v1059 = vld [vmem:[#allocation8 + $0xdb0] sm:$0xff]
    %v1060 = vld [vmem:[#allocation8 + $0xdb8] sm:$0xff]
    %v1061 = vld [vmem:[#allocation8 + $0xdc0] sm:$0xff]
    %v1062 = vld [vmem:[#allocation8 + $0xdc8] sm:$0xff]
    %v1063 = vld [vmem:[#allocation8 + $0xdd0] sm:$0xff]
    %v1064 = vld [vmem:[#allocation8 + $0xdd8] sm:$0xff]
    %v1065 = vld [vmem:[#allocation8 + $0xde0] sm:$0xff]
    %v1066 = vld [vmem:[#allocation8 + $0xde8] sm:$0xff]
    %v1067 = vld [vmem:[#allocation8 + $0xdf0] sm:$0xff]
    %v1068 = vld [vmem:[#allocation8 + $0xdf8] sm:$0xff]
    %1069 = vmatprep.subr.mxu0 %v622
    %1070 = vmatpush1.msra.mxu0 %v621
    %1071 = vmatprep.subr.mxu0 %v629
    %1072 = vmatpush1.msra.mxu0 %v628
    %1073 = vmatprep.subr.mxu0 %v636
    %1074 = vmatpush1.msra.mxu0 %v635
    %1075 = vmatprep.subr.mxu0 %v643
    %1076 = vmatpush1.msra.mxu0 %v642
    %1077 = vmatprep.subr.mxu0 %v650
    %1078 = vmatpush1.msra.mxu0 %v649
    %1079 = vmatprep.subr.mxu0 %v657
    %1080 = vmatpush1.msra.mxu0 %v656
    %1081 = vmatprep.subr.mxu0 %v664
    %1082 = vmatpush1.msra.mxu0 %v663
    %1083 = vmatprep.subr.mxu0 %v671
    %1084 = vmatpush1.msra.mxu0 %v670
    %1085 = vmatprep.subr.mxu0 %v678
    %1086 = vmatpush1.msra.mxu0 %v677
    %1087 = vmatprep.subr.mxu0 %v685
    %1088 = vmatpush1.msra.mxu0 %v684
    %1089 = vmatprep.subr.mxu0 %v692
    %1090 = vmatpush1.msra.mxu0 %v691
    %1091 = vmatprep.subr.mxu0 %v699
    %1092 = vmatpush1.msra.mxu0 %v698
    %1093 = vmatprep.subr.mxu0 %v706
    %1094 = vmatpush1.msra.mxu0 %v705
    %1095 = vmatprep.subr.mxu0 %v713
    %1096 = vmatpush1.msra.mxu0 %v712
    %1097 = vmatprep.subr.mxu0 %v720
    %1098 = vmatpush1.msra.mxu0 %v719
    %1099 = vmatprep.subr.mxu0 %v727
    %1100 = vmatpush1.msra.mxu0 %v726
    %1101 = vmatprep.subr.mxu0 %v734
    %1102 = vmatpush1.msra.mxu0 %v733
    %1103 = vmatprep.subr.mxu0 %v741
    %1104 = vmatpush1.msra.mxu0 %v740
    %1105 = vmatprep.subr.mxu0 %v748
    %1106 = vmatpush1.msra.mxu0 %v747
    %1107 = vmatprep.subr.mxu0 %v755
    %1108 = vmatpush1.msra.mxu0 %v754
    %1109 = vmatprep.subr.mxu0 %v762
    %1110 = vmatpush1.msra.mxu0 %v761
    %1111 = vmatprep.subr.mxu0 %v769
    %1112 = vmatpush1.msra.mxu0 %v768
    %1113 = vmatprep.subr.mxu0 %v776
    %1114 = vmatpush1.msra.mxu0 %v775
    %1115 = vmatprep.subr.mxu0 %v783
    %1116 = vmatpush1.msra.mxu0 %v782
    %1117 = vmatprep.subr.mxu0 %v790
    %1118 = vmatpush1.msra.mxu0 %v789
    %1119 = vmatprep.subr.mxu0 %v797
    %1120 = vmatpush1.msra.mxu0 %v796
    %1121 = vmatprep.subr.mxu0 %v804
    %1122 = vmatpush1.msra.mxu0 %v803
    %1123 = vmatprep.subr.mxu0 %v811
    %1124 = vmatpush1.msra.mxu0 %v810
    %1125 = vmatprep.subr.mxu0 %v818
    %1126 = vmatpush1.msra.mxu0 %v817
    %1127 = vmatprep.subr.mxu0 %v825
    %1128 = vmatpush1.msra.mxu0 %v824
    %1129 = vmatprep.subr.mxu0 %v832
    %1130 = vmatpush1.msra.mxu0 %v831
    %1131 = vmatprep.subr.mxu0 %v839
    %1132 = vmatpush1.msra.mxu0 %v838
    %1133 = vmatprep.mubr.f32.mxu0 %v590
    %1134 = vmatmul.mubr.f32.gmra.mrb[0].mxu0 %v589
    %v1135 = vpop.f32.mrb[0].mxu0
    %v1136 = vadd.f32 0.0, %v1135
    %v1137 = vpop.f32.mrb[0].mxu0
    %v1138 = vadd.f32 0.0, %v1137
    %1139 = vmatprep.mubr.f32.mxu0 %v594
    %1140 = vmatmul.mubr.f32.gmra.mrb[0].mxu0 %v593
    %v1141 = vpop.f32.mrb[0].mxu0
    %v1142 = vadd.f32 0.0, %v1141
    %v1143 = vpop.f32.mrb[0].mxu0
    %v1144 = vadd.f32 0.0, %v1143
    %1145 = vmatprep.mubr.f32.mxu0 %v598
    %1146 = vmatmul.mubr.f32.gmra.mrb[0].mxu0 %v597
    %v1147 = vpop.f32.mrb[0].mxu0
    %v1148 = vadd.f32 0.0, %v1147
    %v1149 = vpop.f32.mrb[0].mxu0
    %v1150 = vadd.f32 0.0, %v1149
    %1151 = vmatprep.mubr.f32.mxu0 %v602
    %1152 = vmatmul.mubr.f32.gmra.mrb[0].mxu0 %v601
    %v1153 = vpop.f32.mrb[0].mxu0
    %v1154 = vadd.f32 0.0, %v1153
    %v1155 = vpop.f32.mrb[0].mxu0
    %v1156 = vadd.f32 0.0, %v1155
    %1157 = vmatprep.mubr.f32.mxu0 %v606
    %1158 = vmatmul.mubr.f32.gmra.mrb[0].mxu0 %v605
    %v1159 = vpop.f32.mrb[0].mxu0
    %v1160 = vadd.f32 0.0, %v1159
    %v1161 = vpop.f32.mrb[0].mxu0
    %v1162 = vadd.f32 0.0, %v1161
    %1163 = vmatprep.mubr.f32.mxu0 %v610
    %1164 = vmatmul.mubr.f32.gmra.mrb[0].mxu0 %v609
    %v1165 = vpop.f32.mrb[0].mxu0
    %v1166 = vadd.f32 0.0, %v1165
    %v1167 = vpop.f32.mrb[0].mxu0
    %v1168 = vadd.f32 0.0, %v1167
    %1169 = vmatprep.mubr.f32.mxu0 %v614
    %1170 = vmatmul.mubr.f32.gmra.mrb[0].mxu0 %v613
    %v1171 = vpop.f32.mrb[0].mxu0
    %v1172 = vadd.f32 0.0, %v1171
    %v1173 = vpop.f32.mrb[0].mxu0
    %v1174 = vadd.f32 0.0, %v1173
    %1175 = vmatprep.mubr.f32.mxu0 %v618
    %1176 = vmatmul.mubr.f32.gmra.mrb[0].mxu0 %v617
    %v1177 = vpop.f32.mrb[0].mxu0
    %v1178 = vadd.f32 0.0, %v1177
    %v1179 = vpop.f32.mrb[0].mxu0
    %v1180 = vadd.f32 0.0, %v1179
    %1181 = vdwg.mxu0
    %1182 = vmatprep.subr.mxu0 %v846
    %1183 = vmatpush1.msra.mxu0 %v845
    %1184 = vmatprep.subr.mxu0 %v853
    %1185 = vmatpush1.msra.mxu0 %v852
    %1186 = vmatprep.subr.mxu0 %v860
    %1187 = vmatpush1.msra.mxu0 %v859
    %1188 = vmatprep.subr.mxu0 %v867
    %1189 = vmatpush1.msra.mxu0 %v866
    %1190 = vmatprep.subr.mxu0 %v874
    %1191 = vmatpush1.msra.mxu0 %v873
    %1192 = vmatprep.subr.mxu0 %v881
    %1193 = vmatpush1.msra.mxu0 %v880
    %1194 = vmatprep.subr.mxu0 %v888
    %1195 = vmatpush1.msra.mxu0 %v887
    %1196 = vmatprep.subr.mxu0 %v895
    %1197 = vmatpush1.msra.mxu0 %v894
    %1198 = vmatprep.subr.mxu0 %v902
    %1199 = vmatpush1.msra.mxu0 %v901
    %1200 = vmatprep.subr.mxu0 %v909
    %1201 = vmatpush1.msra.mxu0 %v908
    %1202 = vmatprep.subr.mxu0 %v916
    %1203 = vmatpush1.msra.mxu0 %v915
    %1204 = vmatprep.subr.mxu0 %v923
    %1205 = vmatpush1.msra.mxu0 %v922
    %1206 = vmatprep.subr.mxu0 %v930
    %1207 = vmatpush1.msra.mxu0 %v929
    %1208 = vmatprep.subr.mxu0 %v937
    %1209 = vmatpush1.msra.mxu0 %v936
    %1210 = vmatprep.subr.mxu0 %v944
    %1211 = vmatpush1.msra.mxu0 %v943
    %1212 = vmatprep.subr.mxu0 %v951
    %1213 = vmatpush1.msra.mxu0 %v950
    %1214 = vmatprep.subr.mxu0 %v958
    %1215 = vmatpush1.msra.mxu0 %v957
    %1216 = vmatprep.subr.mxu0 %v965
    %1217 = vmatpush1.msra.mxu0 %v964
    %1218 = vmatprep.subr.mxu0 %v972
    %1219 = vmatpush1.msra.mxu0 %v971
    %1220 = vmatprep.subr.mxu0 %v979
    %1221 = vmatpush1.msra.mxu0 %v978
    %1222 = vmatprep.subr.mxu0 %v986
    %1223 = vmatpush1.msra.mxu0 %v985
    %1224 = vmatprep.subr.mxu0 %v993
    %1225 = vmatpush1.msra.mxu0 %v992
    %1226 = vmatprep.subr.mxu0 %v1000
    %1227 = vmatpush1.msra.mxu0 %v999
    %1228 = vmatprep.subr.mxu0 %v1007
    %1229 = vmatpush1.msra.mxu0 %v1006
    %1230 = vmatprep.subr.mxu0 %v1014
    %1231 = vmatpush1.msra.mxu0 %v1013
    %1232 = vmatprep.subr.mxu0 %v1021
    %1233 = vmatpush1.msra.mxu0 %v1020
    %1234 = vmatprep.subr.mxu0 %v1028
    %1235 = vmatpush1.msra.mxu0 %v1027
    %1236 = vmatprep.subr.mxu0 %v1035
    %1237 = vmatpush1.msra.mxu0 %v1034
    %1238 = vmatprep.subr.mxu0 %v1042
    %1239 = vmatpush1.msra.mxu0 %v1041
    %1240 = vmatprep.subr.mxu0 %v1049
    %1241 = vmatpush1.msra.mxu0 %v1048
    %1242 = vmatprep.subr.mxu0 %v1056
    %1243 = vmatpush1.msra.mxu0 %v1055
    %1244 = vmatprep.subr.mxu0 %v1063
    %1245 = vmatpush1.msra.mxu0 %v1062
    %1246 = vmatprep.mubr.f32.mxu0 %v592
    %1247 = vmatmul.mubr.f32.gmra.mrb[0].mxu0 %v591
    %v1248 = vpop.f32.mrb[0].mxu0
    %v1249 = vadd.f32 %v1136, %v1248
    %v1250 = vpop.f32.mrb[0].mxu0
    %v1251 = vadd.f32 %v1138, %v1250
    %1252 = vmatprep.mubr.f32.mxu0 %v596
    %1253 = vmatmul.mubr.f32.gmra.mrb[0].mxu0 %v595
    %v1254 = vpop.f32.mrb[0].mxu0
    %v1255 = vadd.f32 %v1142, %v1254
    %v1256 = vpop.f32.mrb[0].mxu0
    %v1257 = vadd.f32 %v1144, %v1256
    %1258 = vmatprep.mubr.f32.mxu0 %v600
    %1259 = vmatmul.mubr.f32.gmra.mrb[0].mxu0 %v599
    %v1260 = vpop.f32.mrb[0].mxu0
    %v1261 = vadd.f32 %v1148, %v1260
    %v1262 = vpop.f32.mrb[0].mxu0
    %v1263 = vadd.f32 %v1150, %v1262
    %1264 = vmatprep.mubr.f32.mxu0 %v604
    %1265 = vmatmul.mubr.f32.gmra.mrb[0].mxu0 %v603
    %v1266 = vpop.f32.mrb[0].mxu0
    %v1267 = vadd.f32 %v1154, %v1266
    %v1268 = vpop.f32.mrb[0].mxu0
    %v1269 = vadd.f32 %v1156, %v1268
    %1270 = vmatprep.mubr.f32.mxu0 %v608
    %1271 = vmatmul.mubr.f32.gmra.mrb[0].mxu0 %v607
    %v1272 = vpop.f32.mrb[0].mxu0
    %v1273 = vadd.f32 %v1160, %v1272
    %v1274 = vpop.f32.mrb[0].mxu0
    %v1275 = vadd.f32 %v1162, %v1274
    %1276 = vmatprep.mubr.f32.mxu0 %v612
    %1277 = vmatmul.mubr.f32.gmra.mrb[0].mxu0 %v611
    %v1278 = vpop.f32.mrb[0].mxu0
    %v1279 = vadd.f32 %v1166, %v1278
    %v1280 = vpop.f32.mrb[0].mxu0
    %v1281 = vadd.f32 %v1168, %v1280
    %1282 = vmatprep.mubr.f32.mxu0 %v616
    %1283 = vmatmul.mubr.f32.gmra.mrb[0].mxu0 %v615
    %v1284 = vpop.f32.mrb[0].mxu0
    %v1285 = vadd.f32 %v1172, %v1284
    %v1286 = vpop.f32.mrb[0].mxu0
    %v1287 = vadd.f32 %v1174, %v1286
    %1288 = vmatprep.mubr.f32.mxu0 %v620
    %1289 = vmatmul.mubr.f32.gmra.mrb[0].mxu0 %v619
    %v1290 = vpop.f32.mrb[0].mxu0
    %v1291 = vadd.f32 %v1178, %v1290
    %v1292 = vpop.f32.mrb[0].mxu0
    %v1293 = vadd.f32 %v1180, %v1292
    %1294 = vdwg.mxu0
    %1295 = vmatprep.subr.mxu0 %v624
    %1296 = vmatpush1.msra.mxu0 %v623
    %1297 = vmatprep.subr.mxu0 %v631
    %1298 = vmatpush1.msra.mxu0 %v630
    %1299 = vmatprep.subr.mxu0 %v638
    %1300 = vmatpush1.msra.mxu0 %v637
    %1301 = vmatprep.subr.mxu0 %v645
    %1302 = vmatpush1.msra.mxu0 %v644
    %1303 = vmatprep.subr.mxu0 %v652
    %1304 = vmatpush1.msra.mxu0 %v651
    %1305 = vmatprep.subr.mxu0 %v659
    %1306 = vmatpush1.msra.mxu0 %v658
    %1307 = vmatprep.subr.mxu0 %v666
    %1308 = vmatpush1.msra.mxu0 %v665
    %1309 = vmatprep.subr.mxu0 %v673
    %1310 = vmatpush1.msra.mxu0 %v672
    %1311 = vmatprep.subr.mxu0 %v680
    %1312 = vmatpush1.msra.mxu0 %v679
    %1313 = vmatprep.subr.mxu0 %v687
    %1314 = vmatpush1.msra.mxu0 %v686
    %1315 = vmatprep.subr.mxu0 %v694
    %1316 = vmatpush1.msra.mxu0 %v693
    %1317 = vmatprep.subr.mxu0 %v701
    %1318 = vmatpush1.msra.mxu0 %v700
    %1319 = vmatprep.subr.mxu0 %v708
    %1320 = vmatpush1.msra.mxu0 %v707
    %1321 = vmatprep.subr.mxu0 %v715
    %1322 = vmatpush1.msra.mxu0 %v714
    %1323 = vmatprep.subr.mxu0 %v722
    %1324 = vmatpush1.msra.mxu0 %v721
    %1325 = vmatprep.subr.mxu0 %v729
    %1326 = vmatpush1.msra.mxu0 %v728
    %1327 = vmatprep.subr.mxu0 %v736
    %1328 = vmatpush1.msra.mxu0 %v735
    %1329 = vmatprep.subr.mxu0 %v743
    %1330 = vmatpush1.msra.mxu0 %v742
    %1331 = vmatprep.subr.mxu0 %v750
    %1332 = vmatpush1.msra.mxu0 %v749
    %1333 = vmatprep.subr.mxu0 %v757
    %1334 = vmatpush1.msra.mxu0 %v756
    %1335 = vmatprep.subr.mxu0 %v764
    %1336 = vmatpush1.msra.mxu0 %v763
    %1337 = vmatprep.subr.mxu0 %v771
    %1338 = vmatpush1.msra.mxu0 %v770
    %1339 = vmatprep.subr.mxu0 %v778
    %1340 = vmatpush1.msra.mxu0 %v777
    %1341 = vmatprep.subr.mxu0 %v785
    %1342 = vmatpush1.msra.mxu0 %v784
    %1343 = vmatprep.subr.mxu0 %v792
    %1344 = vmatpush1.msra.mxu0 %v791
    %1345 = vmatprep.subr.mxu0 %v799
    %1346 = vmatpush1.msra.mxu0 %v798
    %1347 = vmatprep.subr.mxu0 %v806
    %1348 = vmatpush1.msra.mxu0 %v805
    %1349 = vmatprep.subr.mxu0 %v813
    %1350 = vmatpush1.msra.mxu0 %v812
    %1351 = vmatprep.subr.mxu0 %v820
    %1352 = vmatpush1.msra.mxu0 %v819
    %1353 = vmatprep.subr.mxu0 %v827
    %1354 = vmatpush1.msra.mxu0 %v826
    %1355 = vmatprep.subr.mxu0 %v834
    %1356 = vmatpush1.msra.mxu0 %v833
    %1357 = vmatprep.subr.mxu0 %v841
    %1358 = vmatpush1.msra.mxu0 %v840
    %1359 = vmatprep.mubr.f32.mxu0 %v590
    %1360 = vmatmul.mubr.f32.gmra.mrb[0].mxu0 %v589
    %v1361 = vpop.f32.mrb[0].mxu0
    %v1362 = vadd.f32 0.0, %v1361
    %v1363 = vpop.f32.mrb[0].mxu0
    %v1364 = vadd.f32 0.0, %v1363
    %1365 = vmatprep.mubr.f32.mxu0 %v594
    %1366 = vmatmul.mubr.f32.gmra.mrb[0].mxu0 %v593
    %v1367 = vpop.f32.mrb[0].mxu0
    %v1368 = vadd.f32 0.0, %v1367
    %v1369 = vpop.f32.mrb[0].mxu0
    %v1370 = vadd.f32 0.0, %v1369
    %1371 = vmatprep.mubr.f32.mxu0 %v598
    %1372 = vmatmul.mubr.f32.gmra.mrb[0].mxu0 %v597
    %v1373 = vpop.f32.mrb[0].mxu0
    %v1374 = vadd.f32 0.0, %v1373
    %v1375 = vpop.f32.mrb[0].mxu0
    %v1376 = vadd.f32 0.0, %v1375
    %1377 = vmatprep.mubr.f32.mxu0 %v602
    %1378 = vmatmul.mubr.f32.gmra.mrb[0].mxu0 %v601
    %v1379 = vpop.f32.mrb[0].mxu0
    %v1380 = vadd.f32 0.0, %v1379
    %v1381 = vpop.f32.mrb[0].mxu0
    %v1382 = vadd.f32 0.0, %v1381
    %1383 = vmatprep.mubr.f32.mxu0 %v606
    %1384 = vmatmul.mubr.f32.gmra.mrb[0].mxu0 %v605
    %v1385 = vpop.f32.mrb[0].mxu0
    %v1386 = vadd.f32 0.0, %v1385
    %v1387 = vpop.f32.mrb[0].mxu0
    %v1388 = vadd.f32 0.0, %v1387
    %1389 = vmatprep.mubr.f32.mxu0 %v610
    %1390 = vmatmul.mubr.f32.gmra.mrb[0].mxu0 %v609
    %v1391 = vpop.f32.mrb[0].mxu0
    %v1392 = vadd.f32 0.0, %v1391
    %v1393 = vpop.f32.mrb[0].mxu0
    %v1394 = vadd.f32 0.0, %v1393
    %1395 = vmatprep.mubr.f32.mxu0 %v614
    %1396 = vmatmul.mubr.f32.gmra.mrb[0].mxu0 %v613
    %v1397 = vpop.f32.mrb[0].mxu0
    %v1398 = vadd.f32 0.0, %v1397
    %v1399 = vpop.f32.mrb[0].mxu0
    %v1400 = vadd.f32 0.0, %v1399
    %1401 = vmatprep.mubr.f32.mxu0 %v618
    %1402 = vmatmul.mubr.f32.gmra.mrb[0].mxu0 %v617
    %v1403 = vpop.f32.mrb[0].mxu0
    %v1404 = vadd.f32 0.0, %v1403
    %v1405 = vpop.f32.mrb[0].mxu0
    %v1406 = vadd.f32 0.0, %v1405
    %1407 = vdwg.mxu0
    %1408 = vmatprep.subr.mxu0 %v848
    %1409 = vmatpush1.msra.mxu0 %v847
    %1410 = vmatprep.subr.mxu0 %v855
    %1411 = vmatpush1.msra.mxu0 %v854
    %1412 = vmatprep.subr.mxu0 %v862
    %1413 = vmatpush1.msra.mxu0 %v861
    %1414 = vmatprep.subr.mxu0 %v869
    %1415 = vmatpush1.msra.mxu0 %v868
    %1416 = vmatprep.subr.mxu0 %v876
    %1417 = vmatpush1.msra.mxu0 %v875
    %1418 = vmatprep.subr.mxu0 %v883
    %1419 = vmatpush1.msra.mxu0 %v882
    %1420 = vmatprep.subr.mxu0 %v890
    %1421 = vmatpush1.msra.mxu0 %v889
    %1422 = vmatprep.subr.mxu0 %v897
    %1423 = vmatpush1.msra.mxu0 %v896
    %1424 = vmatprep.subr.mxu0 %v904
    %1425 = vmatpush1.msra.mxu0 %v903
    %1426 = vmatprep.subr.mxu0 %v911
    %1427 = vmatpush1.msra.mxu0 %v910
    %1428 = vmatprep.subr.mxu0 %v918
    %1429 = vmatpush1.msra.mxu0 %v917
    %1430 = vmatprep.subr.mxu0 %v925
    %1431 = vmatpush1.msra.mxu0 %v924
    %1432 = vmatprep.subr.mxu0 %v932
    %1433 = vmatpush1.msra.mxu0 %v931
    %1434 = vmatprep.subr.mxu0 %v939
    %1435 = vmatpush1.msra.mxu0 %v938
    %1436 = vmatprep.subr.mxu0 %v946
    %1437 = vmatpush1.msra.mxu0 %v945
    %1438 = vmatprep.subr.mxu0 %v953
    %1439 = vmatpush1.msra.mxu0 %v952
    %1440 = vmatprep.subr.mxu0 %v960
    %1441 = vmatpush1.msra.mxu0 %v959
    %1442 = vmatprep.subr.mxu0 %v967
    %1443 = vmatpush1.msra.mxu0 %v966
    %1444 = vmatprep.subr.mxu0 %v974
    %1445 = vmatpush1.msra.mxu0 %v973
    %1446 = vmatprep.subr.mxu0 %v981
    %1447 = vmatpush1.msra.mxu0 %v980
    %1448 = vmatprep.subr.mxu0 %v988
    %1449 = vmatpush1.msra.mxu0 %v987
    %1450 = vmatprep.subr.mxu0 %v995
    %1451 = vmatpush1.msra.mxu0 %v994
    %1452 = vmatprep.subr.mxu0 %v1002
    %1453 = vmatpush1.msra.mxu0 %v1001
    %1454 = vmatprep.subr.mxu0 %v1009
    %1455 = vmatpush1.msra.mxu0 %v1008
    %1456 = vmatprep.subr.mxu0 %v1016
    %1457 = vmatpush1.msra.mxu0 %v1015
    %1458 = vmatprep.subr.mxu0 %v1023
    %1459 = vmatpush1.msra.mxu0 %v1022
    %1460 = vmatprep.subr.mxu0 %v1030
    %1461 = vmatpush1.msra.mxu0 %v1029
    %1462 = vmatprep.subr.mxu0 %v1037
    %1463 = vmatpush1.msra.mxu0 %v1036
    %1464 = vmatprep.subr.mxu0 %v1044
    %1465 = vmatpush1.msra.mxu0 %v1043
    %1466 = vmatprep.subr.mxu0 %v1051
    %1467 = vmatpush1.msra.mxu0 %v1050
    %1468 = vmatprep.subr.mxu0 %v1058
    %1469 = vmatpush1.msra.mxu0 %v1057
    %1470 = vmatprep.subr.mxu0 %v1065
    %1471 = vmatpush1.msra.mxu0 %v1064
    %1472 = vmatprep.mubr.f32.mxu0 %v592
    %1473 = vmatmul.mubr.f32.gmra.mrb[0].mxu0 %v591
    %v1474 = vpop.f32.mrb[0].mxu0
    %v1475 = vadd.f32 %v1362, %v1474
    %v1476 = vpop.f32.mrb[0].mxu0
    %v1477 = vadd.f32 %v1364, %v1476
    %1478 = vmatprep.mubr.f32.mxu0 %v596
    %1479 = vmatmul.mubr.f32.gmra.mrb[0].mxu0 %v595
    %v1480 = vpop.f32.mrb[0].mxu0
    %v1481 = vadd.f32 %v1368, %v1480
    %v1482 = vpop.f32.mrb[0].mxu0
    %v1483 = vadd.f32 %v1370, %v1482
    %1484 = vmatprep.mubr.f32.mxu0 %v600
    %1485 = vmatmul.mubr.f32.gmra.mrb[0].mxu0 %v599
    %v1486 = vpop.f32.mrb[0].mxu0
    %v1487 = vadd.f32 %v1374, %v1486
    %v1488 = vpop.f32.mrb[0].mxu0
    %v1489 = vadd.f32 %v1376, %v1488
    %1490 = vmatprep.mubr.f32.mxu0 %v604
    %1491 = vmatmul.mubr.f32.gmra.mrb[0].mxu0 %v603
    %v1492 = vpop.f32.mrb[0].mxu0
    %v1493 = vadd.f32 %v1380, %v1492
    %v1494 = vpop.f32.mrb[0].mxu0
    %v1495 = vadd.f32 %v1382, %v1494
    %1496 = vmatprep.mubr.f32.mxu0 %v608
    %1497 = vmatmul.mubr.f32.gmra.mrb[0].mxu0 %v607
    %v1498 = vpop.f32.mrb[0].mxu0
    %v1499 = vadd.f32 %v1386, %v1498
    %v1500 = vpop.f32.mrb[0].mxu0
    %v1501 = vadd.f32 %v1388, %v1500
    %1502 = vmatprep.mubr.f32.mxu0 %v612
    %1503 = vmatmul.mubr.f32.gmra.mrb[0].mxu0 %v611
    %v1504 = vpop.f32.mrb[0].mxu0
    %v1505 = vadd.f32 %v1392, %v1504
    %v1506 = vpop.f32.mrb[0].mxu0
    %v1507 = vadd.f32 %v1394, %v1506
    %1508 = vmatprep.mubr.f32.mxu0 %v616
    %1509 = vmatmul.mubr.f32.gmra.mrb[0].mxu0 %v615
    %v1510 = vpop.f32.mrb[0].mxu0
    %v1511 = vadd.f32 %v1398, %v1510
    %v1512 = vpop.f32.mrb[0].mxu0
    %v1513 = vadd.f32 %v1400, %v1512
    %1514 = vmatprep.mubr.f32.mxu0 %v620
    %1515 = vmatmul.mubr.f32.gmra.mrb[0].mxu0 %v619
    %v1516 = vpop.f32.mrb[0].mxu0
    %v1517 = vadd.f32 %v1404, %v1516
    %v1518 = vpop.f32.mrb[0].mxu0
    %v1519 = vadd.f32 %v1406, %v1518
    %1520 = vdwg.mxu0
    %1521 = vmatprep.subr.mxu0 %v626
    %1522 = vmatpush1.msra.mxu0 %v625
    %1523 = vmatprep.subr.mxu0 %v633
    %1524 = vmatpush1.msra.mxu0 %v632
    %1525 = vmatprep.subr.mxu0 %v640
    %1526 = vmatpush1.msra.mxu0 %v639
    %1527 = vmatprep.subr.mxu0 %v647
    %1528 = vmatpush1.msra.mxu0 %v646
    %1529 = vmatprep.subr.mxu0 %v654
    %1530 = vmatpush1.msra.mxu0 %v653
    %1531 = vmatprep.subr.mxu0 %v661
    %1532 = vmatpush1.msra.mxu0 %v660
    %1533 = vmatprep.subr.mxu0 %v668
    %1534 = vmatpush1.msra.mxu0 %v667
    %1535 = vmatprep.subr.mxu0 %v675
    %1536 = vmatpush1.msra.mxu0 %v674
    %1537 = vmatprep.subr.mxu0 %v682
    %1538 = vmatpush1.msra.mxu0 %v681
    %1539 = vmatprep.subr.mxu0 %v689
    %1540 = vmatpush1.msra.mxu0 %v688
    %1541 = vmatprep.subr.mxu0 %v696
    %1542 = vmatpush1.msra.mxu0 %v695
    %1543 = vmatprep.subr.mxu0 %v703
    %1544 = vmatpush1.msra.mxu0 %v702
    %1545 = vmatprep.subr.mxu0 %v710
    %1546 = vmatpush1.msra.mxu0 %v709
    %1547 = vmatprep.subr.mxu0 %v717
    %1548 = vmatpush1.msra.mxu0 %v716
    %1549 = vmatprep.subr.mxu0 %v724
    %1550 = vmatpush1.msra.mxu0 %v723
    %1551 = vmatprep.subr.mxu0 %v731
    %1552 = vmatpush1.msra.mxu0 %v730
    %1553 = vmatprep.subr.mxu0 %v738
    %1554 = vmatpush1.msra.mxu0 %v737
    %1555 = vmatprep.subr.mxu0 %v745
    %1556 = vmatpush1.msra.mxu0 %v744
    %1557 = vmatprep.subr.mxu0 %v752
    %1558 = vmatpush1.msra.mxu0 %v751
    %1559 = vmatprep.subr.mxu0 %v759
    %1560 = vmatpush1.msra.mxu0 %v758
    %1561 = vmatprep.subr.mxu0 %v766
    %1562 = vmatpush1.msra.mxu0 %v765
    %1563 = vmatprep.subr.mxu0 %v773
    %1564 = vmatpush1.msra.mxu0 %v772
    %1565 = vmatprep.subr.mxu0 %v780
    %1566 = vmatpush1.msra.mxu0 %v779
    %1567 = vmatprep.subr.mxu0 %v787
    %1568 = vmatpush1.msra.mxu0 %v786
    %1569 = vmatprep.subr.mxu0 %v794
    %1570 = vmatpush1.msra.mxu0 %v793
    %1571 = vmatprep.subr.mxu0 %v801
    %1572 = vmatpush1.msra.mxu0 %v800
    %1573 = vmatprep.subr.mxu0 %v808
    %1574 = vmatpush1.msra.mxu0 %v807
    %1575 = vmatprep.subr.mxu0 %v815
    %1576 = vmatpush1.msra.mxu0 %v814
    %1577 = vmatprep.subr.mxu0 %v822
    %1578 = vmatpush1.msra.mxu0 %v821
    %1579 = vmatprep.subr.mxu0 %v829
    %1580 = vmatpush1.msra.mxu0 %v828
    %1581 = vmatprep.subr.mxu0 %v836
    %1582 = vmatpush1.msra.mxu0 %v835
    %1583 = vmatprep.subr.mxu0 %v843
    %1584 = vmatpush1.msra.mxu0 %v842
    %1585 = vmatprep.mubr.f32.mxu0 %v590
    %1586 = vmatmul.mubr.f32.gmra.mrb[0].mxu0 %v589
    %v1587 = vpop.f32.mrb[0].mxu0
    %v1588 = vadd.f32 0.0, %v1587
    %v1589 = vpop.f32.mrb[0].mxu0
    %v1590 = vadd.f32 0.0, %v1589
    %1591 = vmatprep.mubr.f32.mxu0 %v594
    %1592 = vmatmul.mubr.f32.gmra.mrb[0].mxu0 %v593
    %v1593 = vpop.f32.mrb[0].mxu0
    %v1594 = vadd.f32 0.0, %v1593
    %v1595 = vpop.f32.mrb[0].mxu0
    %v1596 = vadd.f32 0.0, %v1595
    %1597 = vmatprep.mubr.f32.mxu0 %v598
    %1598 = vmatmul.mubr.f32.gmra.mrb[0].mxu0 %v597
    %v1599 = vpop.f32.mrb[0].mxu0
    %v1600 = vadd.f32 0.0, %v1599
    %v1601 = vpop.f32.mrb[0].mxu0
    %v1602 = vadd.f32 0.0, %v1601
    %1603 = vmatprep.mubr.f32.mxu0 %v602
    %1604 = vmatmul.mubr.f32.gmra.mrb[0].mxu0 %v601
    %v1605 = vpop.f32.mrb[0].mxu0
    %v1606 = vadd.f32 0.0, %v1605
    %v1607 = vpop.f32.mrb[0].mxu0
    %v1608 = vadd.f32 0.0, %v1607
    %1609 = vmatprep.mubr.f32.mxu0 %v606
    %1610 = vmatmul.mubr.f32.gmra.mrb[0].mxu0 %v605
    %v1611 = vpop.f32.mrb[0].mxu0
    %v1612 = vadd.f32 0.0, %v1611
    %v1613 = vpop.f32.mrb[0].mxu0
    %v1614 = vadd.f32 0.0, %v1613
    %1615 = vmatprep.mubr.f32.mxu0 %v610
    %1616 = vmatmul.mubr.f32.gmra.mrb[0].mxu0 %v609
    %v1617 = vpop.f32.mrb[0].mxu0
    %v1618 = vadd.f32 0.0, %v1617
    %v1619 = vpop.f32.mrb[0].mxu0
    %v1620 = vadd.f32 0.0, %v1619
    %1621 = vmatprep.mubr.f32.mxu0 %v614
    %1622 = vmatmul.mubr.f32.gmra.mrb[0].mxu0 %v613
    %v1623 = vpop.f32.mrb[0].mxu0
    %v1624 = vadd.f32 0.0, %v1623
    %v1625 = vpop.f32.mrb[0].mxu0
    %v1626 = vadd.f32 0.0, %v1625
    %1627 = vmatprep.mubr.f32.mxu0 %v618
    %1628 = vmatmul.mubr.f32.gmra.mrb[0].mxu0 %v617
    %v1629 = vpop.f32.mrb[0].mxu0
    %v1630 = vadd.f32 0.0, %v1629
    %v1631 = vpop.f32.mrb[0].mxu0
    %v1632 = vadd.f32 0.0, %v1631
    %1633 = vdwg.mxu0
    %1634 = vmatprep.subr.mxu0 %v850
    %1635 = vmatpush1.msra.mxu0 %v849
    %1636 = vmatprep.subr.mxu0 %v857
    %1637 = vmatpush1.msra.mxu0 %v856
    %1638 = vmatprep.subr.mxu0 %v864
    %1639 = vmatpush1.msra.mxu0 %v863
    %1640 = vmatprep.subr.mxu0 %v871
    %1641 = vmatpush1.msra.mxu0 %v870
    %1642 = vmatprep.subr.mxu0 %v878
    %1643 = vmatpush1.msra.mxu0 %v877
    %1644 = vmatprep.subr.mxu0 %v885
    %1645 = vmatpush1.msra.mxu0 %v884
    %1646 = vmatprep.subr.mxu0 %v892
    %1647 = vmatpush1.msra.mxu0 %v891
    %1648 = vmatprep.subr.mxu0 %v899
    %1649 = vmatpush1.msra.mxu0 %v898
    %1650 = vmatprep.subr.mxu0 %v906
    %1651 = vmatpush1.msra.mxu0 %v905
    %1652 = vmatprep.subr.mxu0 %v913
    %1653 = vmatpush1.msra.mxu0 %v912
    %1654 = vmatprep.subr.mxu0 %v920
    %1655 = vmatpush1.msra.mxu0 %v919
    %1656 = vmatprep.subr.mxu0 %v927
    %1657 = vmatpush1.msra.mxu0 %v926
    %1658 = vmatprep.subr.mxu0 %v934
    %1659 = vmatpush1.msra.mxu0 %v933
    %1660 = vmatprep.subr.mxu0 %v941
    %1661 = vmatpush1.msra.mxu0 %v940
    %1662 = vmatprep.subr.mxu0 %v948
    %1663 = vmatpush1.msra.mxu0 %v947
    %1664 = vmatprep.subr.mxu0 %v955
    %1665 = vmatpush1.msra.mxu0 %v954
    %1666 = vmatprep.subr.mxu0 %v962
    %1667 = vmatpush1.msra.mxu0 %v961
    %1668 = vmatprep.subr.mxu0 %v969
    %1669 = vmatpush1.msra.mxu0 %v968
    %1670 = vmatprep.subr.mxu0 %v976
    %1671 = vmatpush1.msra.mxu0 %v975
    %1672 = vmatprep.subr.mxu0 %v983
    %1673 = vmatpush1.msra.mxu0 %v982
    %1674 = vmatprep.subr.mxu0 %v990
    %1675 = vmatpush1.msra.mxu0 %v989
    %1676 = vmatprep.subr.mxu0 %v997
    %1677 = vmatpush1.msra.mxu0 %v996
    %1678 = vmatprep.subr.mxu0 %v1004
    %1679 = vmatpush1.msra.mxu0 %v1003
    %1680 = vmatprep.subr.mxu0 %v1011
    %1681 = vmatpush1.msra.mxu0 %v1010
    %1682 = vmatprep.subr.mxu0 %v1018
    %1683 = vmatpush1.msra.mxu0 %v1017
    %1684 = vmatprep.subr.mxu0 %v1025
    %1685 = vmatpush1.msra.mxu0 %v1024
    %1686 = vmatprep.subr.mxu0 %v1032
    %1687 = vmatpush1.msra.mxu0 %v1031
    %1688 = vmatprep.subr.mxu0 %v1039
    %1689 = vmatpush1.msra.mxu0 %v1038
    %1690 = vmatprep.subr.mxu0 %v1046
    %1691 = vmatpush1.msra.mxu0 %v1045
    %1692 = vmatprep.subr.mxu0 %v1053
    %1693 = vmatpush1.msra.mxu0 %v1052
    %1694 = vmatprep.subr.mxu0 %v1060
    %1695 = vmatpush1.msra.mxu0 %v1059
    %1696 = vmatprep.subr.mxu0 %v1067
    %1697 = vmatpush1.msra.mxu0 %v1066
    %1698 = vmatprep.mubr.f32.mxu0 %v592
    %1699 = vmatmul.mubr.f32.gmra.mrb[0].mxu0 %v591
    %v1700 = vpop.f32.mrb[0].mxu0
    %v1701 = vadd.f32 %v1588, %v1700
    %v1702 = vpop.f32.mrb[0].mxu0
    %v1703 = vadd.f32 %v1590, %v1702
    %1704 = vmatprep.mubr.f32.mxu0 %v596
    %1705 = vmatmul.mubr.f32.gmra.mrb[0].mxu0 %v595
    %v1706 = vpop.f32.mrb[0].mxu0
    %v1707 = vadd.f32 %v1594, %v1706
    %v1708 = vpop.f32.mrb[0].mxu0
    %v1709 = vadd.f32 %v1596, %v1708
    %1710 = vmatprep.mubr.f32.mxu0 %v600
    %1711 = vmatmul.mubr.f32.gmra.mrb[0].mxu0 %v599
    %v1712 = vpop.f32.mrb[0].mxu0
    %v1713 = vadd.f32 %v1600, %v1712
    %v1714 = vpop.f32.mrb[0].mxu0
    %v1715 = vadd.f32 %v1602, %v1714
    %1716 = vmatprep.mubr.f32.mxu0 %v604
    %1717 = vmatmul.mubr.f32.gmra.mrb[0].mxu0 %v603
    %v1718 = vpop.f32.mrb[0].mxu0
    %v1719 = vadd.f32 %v1606, %v1718
    %v1720 = vpop.f32.mrb[0].mxu0
    %v1721 = vadd.f32 %v1608, %v1720
    %1722 = vmatprep.mubr.f32.mxu0 %v608
    %1723 = vmatmul.mubr.f32.gmra.mrb[0].mxu0 %v607
    %v1724 = vpop.f32.mrb[0].mxu0
    %v1725 = vadd.f32 %v1612, %v1724
    %v1726 = vpop.f32.mrb[0].mxu0
    %v1727 = vadd.f32 %v1614, %v1726
    %1728 = vmatprep.mubr.f32.mxu0 %v612
    %1729 = vmatmul.mubr.f32.gmra.mrb[0].mxu0 %v611
    %v1730 = vpop.f32.mrb[0].mxu0
    %v1731 = vadd.f32 %v1618, %v1730
    %v1732 = vpop.f32.mrb[0].mxu0
    %v1733 = vadd.f32 %v1620, %v1732
    %1734 = vmatprep.mubr.f32.mxu0 %v616
    %1735 = vmatmul.mubr.f32.gmra.mrb[0].mxu0 %v615
    %v1736 = vpop.f32.mrb[0].mxu0
    %v1737 = vadd.f32 %v1624, %v1736
    %v1738 = vpop.f32.mrb[0].mxu0
    %v1739 = vadd.f32 %v1626, %v1738
    %1740 = vmatprep.mubr.f32.mxu0 %v620
    %1741 = vmatmul.mubr.f32.gmra.mrb[0].mxu0 %v619
    %v1742 = vpop.f32.mrb[0].mxu0
    %v1743 = vadd.f32 %v1630, %v1742
    %v1744 = vpop.f32.mrb[0].mxu0
    %v1745 = vadd.f32 %v1632, %v1744
    %1746 = vdwg.mxu0
    %1747 = vmatprep.subr.mxu0 0.0
    %1748 = vmatpush1.msra.mxu0 %v627
    %1749 = vmatprep.subr.mxu0 0.0
    %1750 = vmatpush1.msra.mxu0 %v634
    %1751 = vmatprep.subr.mxu0 0.0
    %1752 = vmatpush1.msra.mxu0 %v641
    %1753 = vmatprep.subr.mxu0 0.0
    %1754 = vmatpush1.msra.mxu0 %v648
    %1755 = vmatprep.subr.mxu0 0.0
    %1756 = vmatpush1.msra.mxu0 %v655
    %1757 = vmatprep.subr.mxu0 0.0
    %1758 = vmatpush1.msra.mxu0 %v662
    %1759 = vmatprep.subr.mxu0 0.0
    %1760 = vmatpush1.msra.mxu0 %v669
    %1761 = vmatprep.subr.mxu0 0.0
    %1762 = vmatpush1.msra.mxu0 %v676
    %1763 = vmatprep.subr.mxu0 0.0
    %1764 = vmatpush1.msra.mxu0 %v683
    %1765 = vmatprep.subr.mxu0 0.0
    %1766 = vmatpush1.msra.mxu0 %v690
    %1767 = vmatprep.subr.mxu0 0.0
    %1768 = vmatpush1.msra.mxu0 %v697
    %1769 = vmatprep.subr.mxu0 0.0
    %1770 = vmatpush1.msra.mxu0 %v704
    %1771 = vmatprep.subr.mxu0 0.0
    %1772 = vmatpush1.msra.mxu0 %v711
    %1773 = vmatprep.subr.mxu0 0.0
    %1774 = vmatpush1.msra.mxu0 %v718
    %1775 = vmatprep.subr.mxu0 0.0
    %1776 = vmatpush1.msra.mxu0 %v725
    %1777 = vmatprep.subr.mxu0 0.0
    %1778 = vmatpush1.msra.mxu0 %v732
    %1779 = vmatprep.subr.mxu0 0.0
    %1780 = vmatpush1.msra.mxu0 %v739
    %1781 = vmatprep.subr.mxu0 0.0
    %1782 = vmatpush1.msra.mxu0 %v746
    %1783 = vmatprep.subr.mxu0 0.0
    %1784 = vmatpush1.msra.mxu0 %v753
    %1785 = vmatprep.subr.mxu0 0.0
    %1786 = vmatpush1.msra.mxu0 %v760
    %1787 = vmatprep.subr.mxu0 0.0
    %1788 = vmatpush1.msra.mxu0 %v767
    %1789 = vmatprep.subr.mxu0 0.0
    %1790 = vmatpush1.msra.mxu0 %v774
    %1791 = vmatprep.subr.mxu0 0.0
    %1792 = vmatpush1.msra.mxu0 %v781
    %1793 = vmatprep.subr.mxu0 0.0
    %1794 = vmatpush1.msra.mxu0 %v788
    %1795 = vmatprep.subr.mxu0 0.0
    %1796 = vmatpush1.msra.mxu0 %v795
    %1797 = vmatprep.subr.mxu0 0.0
    %1798 = vmatpush1.msra.mxu0 %v802
    %1799 = vmatprep.subr.mxu0 0.0
    %1800 = vmatpush1.msra.mxu0 %v809
    %1801 = vmatprep.subr.mxu0 0.0
    %1802 = vmatpush1.msra.mxu0 %v816
    %1803 = vmatprep.subr.mxu0 0.0
    %1804 = vmatpush1.msra.mxu0 %v823
    %1805 = vmatprep.subr.mxu0 0.0
    %1806 = vmatpush1.msra.mxu0 %v830
    %1807 = vmatprep.subr.mxu0 0.0
    %1808 = vmatpush1.msra.mxu0 %v837
    %1809 = vmatprep.subr.mxu0 0.0
    %1810 = vmatpush1.msra.mxu0 %v844
    %1811 = vmatprep.mubr.f32.mxu0 %v590
    %1812 = vmatmul.mubr.f32.gmra.mrb[0].mxu0 %v589
    %v1813 = vpop.f32.mrb[0].mxu0
    %v1814 = vadd.f32 0.0, %v1813
    %v1815 = vpop.f32.mrb[0].mxu0
    %1816 = vmatprep.mubr.f32.mxu0 %v594
    %1817 = vmatmul.mubr.f32.gmra.mrb[0].mxu0 %v593
    %v1818 = vpop.f32.mrb[0].mxu0
    %v1819 = vadd.f32 0.0, %v1818
    %v1820 = vpop.f32.mrb[0].mxu0
    %1821 = vmatprep.mubr.f32.mxu0 %v598
    %1822 = vmatmul.mubr.f32.gmra.mrb[0].mxu0 %v597
    %v1823 = vpop.f32.mrb[0].mxu0
    %v1824 = vadd.f32 0.0, %v1823
    %v1825 = vpop.f32.mrb[0].mxu0
    %1826 = vmatprep.mubr.f32.mxu0 %v602
    %1827 = vmatmul.mubr.f32.gmra.mrb[0].mxu0 %v601
    %v1828 = vpop.f32.mrb[0].mxu0
    %v1829 = vadd.f32 0.0, %v1828
    %v1830 = vpop.f32.mrb[0].mxu0
    %1831 = vmatprep.mubr.f32.mxu0 %v606
    %1832 = vmatmul.mubr.f32.gmra.mrb[0].mxu0 %v605
    %v1833 = vpop.f32.mrb[0].mxu0
    %v1834 = vadd.f32 0.0, %v1833
    %v1835 = vpop.f32.mrb[0].mxu0
    %1836 = vmatprep.mubr.f32.mxu0 %v610
    %1837 = vmatmul.mubr.f32.gmra.mrb[0].mxu0 %v609
    %v1838 = vpop.f32.mrb[0].mxu0
    %v1839 = vadd.f32 0.0, %v1838
    %v1840 = vpop.f32.mrb[0].mxu0
    %1841 = vmatprep.mubr.f32.mxu0 %v614
    %1842 = vmatmul.mubr.f32.gmra.mrb[0].mxu0 %v613
    %v1843 = vpop.f32.mrb[0].mxu0
    %v1844 = vadd.f32 0.0, %v1843
    %v1845 = vpop.f32.mrb[0].mxu0
    %1846 = vmatprep.mubr.f32.mxu0 %v618
    %1847 = vmatmul.mubr.f32.gmra.mrb[0].mxu0 %v617
    %v1848 = vpop.f32.mrb[0].mxu0
    %v1849 = vadd.f32 0.0, %v1848
    %v1850 = vpop.f32.mrb[0].mxu0
    %1851 = vdwg.mxu0
    %1852 = vmatprep.subr.mxu0 0.0
    %1853 = vmatpush1.msra.mxu0 %v851
    %1854 = vmatprep.subr.mxu0 0.0
    %1855 = vmatpush1.msra.mxu0 %v858
    %1856 = vmatprep.subr.mxu0 0.0
    %1857 = vmatpush1.msra.mxu0 %v865
    %1858 = vmatprep.subr.mxu0 0.0
    %1859 = vmatpush1.msra.mxu0 %v872
    %1860 = vmatprep.subr.mxu0 0.0
    %1861 = vmatpush1.msra.mxu0 %v879
    %1862 = vmatprep.subr.mxu0 0.0
    %1863 = vmatpush1.msra.mxu0 %v886
    %1864 = vmatprep.subr.mxu0 0.0
    %1865 = vmatpush1.msra.mxu0 %v893
    %1866 = vmatprep.subr.mxu0 0.0
    %1867 = vmatpush1.msra.mxu0 %v900
    %1868 = vmatprep.subr.mxu0 0.0
    %1869 = vmatpush1.msra.mxu0 %v907
    %1870 = vmatprep.subr.mxu0 0.0
    %1871 = vmatpush1.msra.mxu0 %v914
    %1872 = vmatprep.subr.mxu0 0.0
    %1873 = vmatpush1.msra.mxu0 %v921
    %1874 = vmatprep.subr.mxu0 0.0
    %1875 = vmatpush1.msra.mxu0 %v928
    %1876 = vmatprep.subr.mxu0 0.0
    %1877 = vmatpush1.msra.mxu0 %v935
    %1878 = vmatprep.subr.mxu0 0.0
    %1879 = vmatpush1.msra.mxu0 %v942
    %1880 = vmatprep.subr.mxu0 0.0
    %1881 = vmatpush1.msra.mxu0 %v949
    %1882 = vmatprep.subr.mxu0 0.0
    %1883 = vmatpush1.msra.mxu0 %v956
    %1884 = vmatprep.subr.mxu0 0.0
    %1885 = vmatpush1.msra.mxu0 %v963
    %1886 = vmatprep.subr.mxu0 0.0
    %1887 = vmatpush1.msra.mxu0 %v970
    %1888 = vmatprep.subr.mxu0 0.0
    %1889 = vmatpush1.msra.mxu0 %v977
    %1890 = vmatprep.subr.mxu0 0.0
    %1891 = vmatpush1.msra.mxu0 %v984
    %1892 = vmatprep.subr.mxu0 0.0
    %1893 = vmatpush1.msra.mxu0 %v991
    %1894 = vmatprep.subr.mxu0 0.0
    %1895 = vmatpush1.msra.mxu0 %v998
    %1896 = vmatprep.subr.mxu0 0.0
    %1897 = vmatpush1.msra.mxu0 %v1005
    %1898 = vmatprep.subr.mxu0 0.0
    %1899 = vmatpush1.msra.mxu0 %v1012
    %1900 = vmatprep.subr.mxu0 0.0
    %1901 = vmatpush1.msra.mxu0 %v1019
    %1902 = vmatprep.subr.mxu0 0.0
    %1903 = vmatpush1.msra.mxu0 %v1026
    %1904 = vmatprep.subr.mxu0 0.0
    %1905 = vmatpush1.msra.mxu0 %v1033
    %1906 = vmatprep.subr.mxu0 0.0
    %1907 = vmatpush1.msra.mxu0 %v1040
    %1908 = vmatprep.subr.mxu0 0.0
    %1909 = vmatpush1.msra.mxu0 %v1047
    %1910 = vmatprep.subr.mxu0 0.0
    %1911 = vmatpush1.msra.mxu0 %v1054
    %1912 = vmatprep.subr.mxu0 0.0
    %1913 = vmatpush1.msra.mxu0 %v1061
    %1914 = vmatprep.subr.mxu0 0.0
    %1915 = vmatpush1.msra.mxu0 %v1068
    %1916 = vmatprep.mubr.f32.mxu0 %v592
    %1917 = vmatmul.mubr.f32.gmra.mrb[0].mxu0 %v591
    %v1918 = vpop.f32.mrb[0].mxu0
    %v1919 = vadd.f32 %v1814, %v1918
    %v1920 = vpop.f32.mrb[0].mxu0
    %1921 = vmatprep.mubr.f32.mxu0 %v596
    %1922 = vmatmul.mubr.f32.gmra.mrb[0].mxu0 %v595
    %v1923 = vpop.f32.mrb[0].mxu0
    %v1924 = vadd.f32 %v1819, %v1923
    %v1925 = vpop.f32.mrb[0].mxu0
    %1926 = vmatprep.mubr.f32.mxu0 %v600
    %1927 = vmatmul.mubr.f32.gmra.mrb[0].mxu0 %v599
    %v1928 = vpop.f32.mrb[0].mxu0
    %v1929 = vadd.f32 %v1824, %v1928
    %v1930 = vpop.f32.mrb[0].mxu0
    %1931 = vmatprep.mubr.f32.mxu0 %v604
    %1932 = vmatmul.mubr.f32.gmra.mrb[0].mxu0 %v603
    %v1933 = vpop.f32.mrb[0].mxu0
    %v1934 = vadd.f32 %v1829, %v1933
    %v1935 = vpop.f32.mrb[0].mxu0
    %1936 = vmatprep.mubr.f32.mxu0 %v608
    %1937 = vmatmul.mubr.f32.gmra.mrb[0].mxu0 %v607
    %v1938 = vpop.f32.mrb[0].mxu0
    %v1939 = vadd.f32 %v1834, %v1938
    %v1940 = vpop.f32.mrb[0].mxu0
    %1941 = vmatprep.mubr.f32.mxu0 %v612
    %1942 = vmatmul.mubr.f32.gmra.mrb[0].mxu0 %v611
    %v1943 = vpop.f32.mrb[0].mxu0
    %v1944 = vadd.f32 %v1839, %v1943
    %v1945 = vpop.f32.mrb[0].mxu0
    %1946 = vmatprep.mubr.f32.mxu0 %v616
    %1947 = vmatmul.mubr.f32.gmra.mrb[0].mxu0 %v615
    %v1948 = vpop.f32.mrb[0].mxu0
    %v1949 = vadd.f32 %v1844, %v1948
    %v1950 = vpop.f32.mrb[0].mxu0
    %1951 = vmatprep.mubr.f32.mxu0 %v620
    %1952 = vmatmul.mubr.f32.gmra.mrb[0].mxu0 %v619
    %v1953 = vpop.f32.mrb[0].mxu0
    %v1954 = vadd.f32 %v1849, %v1953
    %v1955 = vpop.f32.mrb[0].mxu0
    %1956 = vdwg.mxu0
    %v1957 = vpack.c.bf16 %v1255, %v1249
    %v1958 = vpack.c.bf16 %v1257, %v1251
    %v1959 = vpack.c.bf16 %v1481, %v1475
    %v1960 = vpack.c.bf16 %v1483, %v1477
    %v1961 = vpack.c.bf16 %v1707, %v1701
    %v1962 = vpack.c.bf16 %v1709, %v1703
    %v1963 = vpack.c.bf16 %v1924, %v1919
    %v1964 = vpack.c.bf16 %v1267, %v1261
    %v1965 = vpack.c.bf16 %v1269, %v1263
    %v1966 = vpack.c.bf16 %v1493, %v1487
    %v1967 = vpack.c.bf16 %v1495, %v1489
    %v1968 = vpack.c.bf16 %v1719, %v1713
    %v1969 = vpack.c.bf16 %v1721, %v1715
    %v1970 = vpack.c.bf16 %v1934, %v1929
    %v1971 = vpack.c.bf16 %v1279, %v1273
    %v1972 = vpack.c.bf16 %v1281, %v1275
    %v1973 = vpack.c.bf16 %v1505, %v1499
    %v1974 = vpack.c.bf16 %v1507, %v1501
    %v1975 = vpack.c.bf16 %v1731, %v1725
    %v1976 = vpack.c.bf16 %v1733, %v1727
    %v1977 = vpack.c.bf16 %v1944, %v1939
    %v1978 = vpack.c.bf16 %v1291, %v1285
    %v1979 = vpack.c.bf16 %v1293, %v1287
    %v1980 = vpack.c.bf16 %v1517, %v1511
    %v1981 = vpack.c.bf16 %v1519, %v1513
    %v1982 = vpack.c.bf16 %v1743, %v1737
    %v1983 = vpack.c.bf16 %v1745, %v1739
    %v1984 = vpack.c.bf16 %v1954, %v1949
    %v1985 = vld [vmem:[#allocation10] sm:$0xff]
    %v1987 = vlaneseq
    %v1988 = vshrl.u32 %v1987, 7
    %v1989 = vsub.s32 0, %v1988
    %v1990 = vrot.slane %v1985, %v1989
    %v1991 = vlaneseq
    %v1992 = vshrl.u32 %v1991, 7
    %v1993 = vsub.s32 1, %v1992
    %v1994 = vrot.slane %v1985, %v1993
    %v1995 = vlaneseq
    %v1996 = vshrl.u32 %v1995, 7
    %v1997 = vsub.s32 2, %v1996
    %v1998 = vrot.slane %v1985, %v1997
    %v1999 = vlaneseq
    %v2000 = vshrl.u32 %v1999, 7
    %v2001 = vsub.s32 3, %v2000
    %v2002 = vrot.slane %v1985, %v2001
    %v2003 = vlaneseq
    %v2004 = vshrl.u32 %v2003, 7
    %v2005 = vsub.s32 4, %v2004
    %v2006 = vrot.slane %v1985, %v2005
    %v2007 = vlaneseq
    %v2008 = vshrl.u32 %v2007, 7
    %v2009 = vsub.s32 5, %v2008
    %v2010 = vrot.slane %v1985, %v2009
    %v2011 = vlaneseq
    %v2012 = vshrl.u32 %v2011, 7
    %v2013 = vsub.s32 6, %v2012
    %v2014 = vrot.slane %v1985, %v2013
    %2022 = vmatprep.subr.bf16.mxu0 %v1958
    %2023 = vmatpush1.bf16.msra.mxu0 %v1957
    %2024 = vmatprep.subr.bf16.mxu0 %v1965
    %2025 = vmatpush1.bf16.msra.mxu0 %v1964
    %2026 = vmatprep.subr.bf16.mxu0 %v1972
    %2027 = vmatpush1.bf16.msra.mxu0 %v1971
    %2028 = vmatprep.subr.bf16.mxu0 %v1979
    %2029 = vmatpush1.bf16.msra.mxu0 %v1978
    %2030 = vmatprep.subr.bf16.mxu0 0
    %2031 = vmatpush1.bf16.msra.mxu0 0
    %2032 = vmatprep.subr.bf16.mxu0 0
    %2033 = vmatpush1.bf16.msra.mxu0 0
    %2034 = vmatprep.subr.bf16.mxu0 0
    %2035 = vmatpush1.bf16.msra.mxu0 0
    %2036 = vmatprep.subr.bf16.mxu0 0
    %2037 = vmatpush1.bf16.msra.mxu0 0
    %2038 = vmatprep.subr.bf16.mxu0 0
    %2039 = vmatpush1.bf16.msra.mxu0 0
    %2040 = vmatprep.subr.bf16.mxu0 0
    %2041 = vmatpush1.bf16.msra.mxu0 0
    %2042 = vmatprep.subr.bf16.mxu0 0
    %2043 = vmatpush1.bf16.msra.mxu0 0
    %2044 = vmatprep.subr.bf16.mxu0 0
    %2045 = vmatpush1.bf16.msra.mxu0 0
    %2046 = vmatprep.subr.bf16.mxu0 0
    %2047 = vmatpush1.bf16.msra.mxu0 0
    %2048 = vmatprep.subr.bf16.mxu0 0
    %2049 = vmatpush1.bf16.msra.mxu0 0
    %2050 = vmatprep.subr.bf16.mxu0 0
    %2051 = vmatpush1.bf16.msra.mxu0 0
    %2052 = vmatprep.subr.bf16.mxu0 0
    %2053 = vmatpush1.bf16.msra.mxu0 0
    %2054 = vmatprep.mubr.bf16.mxu0 0
    %2055 = vmatmul.mubr.bf16.gmra.mrb[0].mxu0 %v432
    %v2056 = vpop.f32.mrb[0].mxu0
    %v2057 = vadd.f32 %v1990, %v2056
    %v2058 = vpop.f32.mrb[0].mxu0
    %v2059 = vadd.f32 %v1994, %v2058
    %v2060 = vpop.f32.mrb[0].mxu0
    %v2061 = vadd.f32 %v1990, %v2060
    %v2062 = vpop.f32.mrb[0].mxu0
    %v2063 = vadd.f32 %v1994, %v2062
    %2064 = vmatprep.mubr.bf16.mxu0 0
    %2065 = vmatmul.mubr.bf16.gmra.mrb[0].mxu0 %v435
    %v2066 = vpop.f32.mrb[0].mxu0
    %v2067 = vadd.f32 %v1990, %v2066
    %v2068 = vpop.f32.mrb[0].mxu0
    %v2069 = vadd.f32 %v1994, %v2068
    %v2070 = vpop.f32.mrb[0].mxu0
    %v2071 = vadd.f32 %v1990, %v2070
    %v2072 = vpop.f32.mrb[0].mxu0
    %v2073 = vadd.f32 %v1994, %v2072
    %2074 = vmatprep.mubr.bf16.mxu0 0
    %2075 = vmatmul.mubr.bf16.gmra.mrb[0].mxu0 %v438
    %v2076 = vpop.f32.mrb[0].mxu0
    %v2077 = vadd.f32 %v1990, %v2076
    %v2078 = vpop.f32.mrb[0].mxu0
    %v2079 = vadd.f32 %v1994, %v2078
    %v2080 = vpop.f32.mrb[0].mxu0
    %v2081 = vadd.f32 %v1990, %v2080
    %v2082 = vpop.f32.mrb[0].mxu0
    %v2083 = vadd.f32 %v1994, %v2082
    %2084 = vmatprep.mubr.bf16.mxu0 0
    %2085 = vmatmul.mubr.bf16.gmra.mrb[0].mxu0 %v441
    %v2086 = vpop.f32.mrb[0].mxu0
    %v2087 = vadd.f32 %v1990, %v2086
    %v2088 = vpop.f32.mrb[0].mxu0
    %v2089 = vadd.f32 %v1994, %v2088
    %v2090 = vpop.f32.mrb[0].mxu0
    %v2091 = vadd.f32 %v1990, %v2090
    %v2092 = vpop.f32.mrb[0].mxu0
    %v2093 = vadd.f32 %v1994, %v2092
    %2094 = vdwg.mxu0
    %2095 = vmatprep.subr.bf16.mxu0 %v1960
    %2096 = vmatpush1.bf16.msra.mxu0 %v1959
    %2097 = vmatprep.subr.bf16.mxu0 %v1967
    %2098 = vmatpush1.bf16.msra.mxu0 %v1966
    %2099 = vmatprep.subr.bf16.mxu0 %v1974
    %2100 = vmatpush1.bf16.msra.mxu0 %v1973
    %2101 = vmatprep.subr.bf16.mxu0 %v1981
    %2102 = vmatpush1.bf16.msra.mxu0 %v1980
    %2103 = vmatprep.subr.bf16.mxu0 0
    %2104 = vmatpush1.bf16.msra.mxu0 0
    %2105 = vmatprep.subr.bf16.mxu0 0
    %2106 = vmatpush1.bf16.msra.mxu0 0
    %2107 = vmatprep.subr.bf16.mxu0 0
    %2108 = vmatpush1.bf16.msra.mxu0 0
    %2109 = vmatprep.subr.bf16.mxu0 0
    %2110 = vmatpush1.bf16.msra.mxu0 0
    %2111 = vmatprep.subr.bf16.mxu0 0
    %2112 = vmatpush1.bf16.msra.mxu0 0
    %2113 = vmatprep.subr.bf16.mxu0 0
    %2114 = vmatpush1.bf16.msra.mxu0 0
    %2115 = vmatprep.subr.bf16.mxu0 0
    %2116 = vmatpush1.bf16.msra.mxu0 0
    %2117 = vmatprep.subr.bf16.mxu0 0
    %2118 = vmatpush1.bf16.msra.mxu0 0
    %2119 = vmatprep.subr.bf16.mxu0 0
    %2120 = vmatpush1.bf16.msra.mxu0 0
    %2121 = vmatprep.subr.bf16.mxu0 0
    %2122 = vmatpush1.bf16.msra.mxu0 0
    %2123 = vmatprep.subr.bf16.mxu0 0
    %2124 = vmatpush1.bf16.msra.mxu0 0
    %2125 = vmatprep.subr.bf16.mxu0 0
    %2126 = vmatpush1.bf16.msra.mxu0 0
    %2127 = vmatprep.mubr.bf16.mxu0 0
    %2128 = vmatmul.mubr.bf16.gmra.mrb[0].mxu0 %v432
    %v2129 = vpop.f32.mrb[0].mxu0
    %v2130 = vadd.f32 %v1998, %v2129
    %v2131 = vpop.f32.mrb[0].mxu0
    %v2132 = vadd.f32 %v2002, %v2131
    %v2133 = vpop.f32.mrb[0].mxu0
    %v2134 = vadd.f32 %v1998, %v2133
    %v2135 = vpop.f32.mrb[0].mxu0
    %v2136 = vadd.f32 %v2002, %v2135
    %2137 = vmatprep.mubr.bf16.mxu0 0
    %2138 = vmatmul.mubr.bf16.gmra.mrb[0].mxu0 %v435
    %v2139 = vpop.f32.mrb[0].mxu0
    %v2140 = vadd.f32 %v1998, %v2139
    %v2141 = vpop.f32.mrb[0].mxu0
    %v2142 = vadd.f32 %v2002, %v2141
    %v2143 = vpop.f32.mrb[0].mxu0
    %v2144 = vadd.f32 %v1998, %v2143
    %v2145 = vpop.f32.mrb[0].mxu0
    %v2146 = vadd.f32 %v2002, %v2145
    %2147 = vmatprep.mubr.bf16.mxu0 0
    %2148 = vmatmul.mubr.bf16.gmra.mrb[0].mxu0 %v438
    %v2149 = vpop.f32.mrb[0].mxu0
    %v2150 = vadd.f32 %v1998, %v2149
    %v2151 = vpop.f32.mrb[0].mxu0
    %v2152 = vadd.f32 %v2002, %v2151
    %v2153 = vpop.f32.mrb[0].mxu0
    %v2154 = vadd.f32 %v1998, %v2153
    %v2155 = vpop.f32.mrb[0].mxu0
    %v2156 = vadd.f32 %v2002, %v2155
    %2157 = vmatprep.mubr.bf16.mxu0 0
    %2158 = vmatmul.mubr.bf16.gmra.mrb[0].mxu0 %v441
    %v2159 = vpop.f32.mrb[0].mxu0
    %v2160 = vadd.f32 %v1998, %v2159
    %v2161 = vpop.f32.mrb[0].mxu0
    %v2162 = vadd.f32 %v2002, %v2161
    %v2163 = vpop.f32.mrb[0].mxu0
    %v2164 = vadd.f32 %v1998, %v2163
    %v2165 = vpop.f32.mrb[0].mxu0
    %v2166 = vadd.f32 %v2002, %v2165
    %2167 = vdwg.mxu0
    %2168 = vmatprep.subr.bf16.mxu0 %v1962
    %2169 = vmatpush1.bf16.msra.mxu0 %v1961
    %2170 = vmatprep.subr.bf16.mxu0 %v1969
    %2171 = vmatpush1.bf16.msra.mxu0 %v1968
    %2172 = vmatprep.subr.bf16.mxu0 %v1976
    %2173 = vmatpush1.bf16.msra.mxu0 %v1975
    %2174 = vmatprep.subr.bf16.mxu0 %v1983
    %2175 = vmatpush1.bf16.msra.mxu0 %v1982
    %2176 = vmatprep.subr.bf16.mxu0 0
    %2177 = vmatpush1.bf16.msra.mxu0 0
    %2178 = vmatprep.subr.bf16.mxu0 0
    %2179 = vmatpush1.bf16.msra.mxu0 0
    %2180 = vmatprep.subr.bf16.mxu0 0
    %2181 = vmatpush1.bf16.msra.mxu0 0
    %2182 = vmatprep.subr.bf16.mxu0 0
    %2183 = vmatpush1.bf16.msra.mxu0 0
    %2184 = vmatprep.subr.bf16.mxu0 0
    %2185 = vmatpush1.bf16.msra.mxu0 0
    %2186 = vmatprep.subr.bf16.mxu0 0
    %2187 = vmatpush1.bf16.msra.mxu0 0
    %2188 = vmatprep.subr.bf16.mxu0 0
    %2189 = vmatpush1.bf16.msra.mxu0 0
    %2190 = vmatprep.subr.bf16.mxu0 0
    %2191 = vmatpush1.bf16.msra.mxu0 0
    %2192 = vmatprep.subr.bf16.mxu0 0
    %2193 = vmatpush1.bf16.msra.mxu0 0
    %2194 = vmatprep.subr.bf16.mxu0 0
    %2195 = vmatpush1.bf16.msra.mxu0 0
    %2196 = vmatprep.subr.bf16.mxu0 0
    %2197 = vmatpush1.bf16.msra.mxu0 0
    %2198 = vmatprep.subr.bf16.mxu0 0
    %2199 = vmatpush1.bf16.msra.mxu0 0
    %2200 = vmatprep.mubr.bf16.mxu0 0
    %2201 = vmatmul.mubr.bf16.gmra.mrb[0].mxu0 %v432
    %v2202 = vpop.f32.mrb[0].mxu0
    %v2203 = vadd.f32 %v2006, %v2202
    %v2204 = vpop.f32.mrb[0].mxu0
    %v2205 = vadd.f32 %v2010, %v2204
    %v2206 = vpop.f32.mrb[0].mxu0
    %v2207 = vadd.f32 %v2006, %v2206
    %v2208 = vpop.f32.mrb[0].mxu0
    %v2209 = vadd.f32 %v2010, %v2208
    %2210 = vmatprep.mubr.bf16.mxu0 0
    %2211 = vmatmul.mubr.bf16.gmra.mrb[0].mxu0 %v435
    %v2212 = vpop.f32.mrb[0].mxu0
    %v2213 = vadd.f32 %v2006, %v2212
    %v2214 = vpop.f32.mrb[0].mxu0
    %v2215 = vadd.f32 %v2010, %v2214
    %v2216 = vpop.f32.mrb[0].mxu0
    %v2217 = vadd.f32 %v2006, %v2216
    %v2218 = vpop.f32.mrb[0].mxu0
    %v2219 = vadd.f32 %v2010, %v2218
    %2220 = vmatprep.mubr.bf16.mxu0 0
    %2221 = vmatmul.mubr.bf16.gmra.mrb[0].mxu0 %v438
    %v2222 = vpop.f32.mrb[0].mxu0
    %v2223 = vadd.f32 %v2006, %v2222
    %v2224 = vpop.f32.mrb[0].mxu0
    %v2225 = vadd.f32 %v2010, %v2224
    %v2226 = vpop.f32.mrb[0].mxu0
    %v2227 = vadd.f32 %v2006, %v2226
    %v2228 = vpop.f32.mrb[0].mxu0
    %v2229 = vadd.f32 %v2010, %v2228
    %2230 = vmatprep.mubr.bf16.mxu0 0
    %2231 = vmatmul.mubr.bf16.gmra.mrb[0].mxu0 %v441
    %v2232 = vpop.f32.mrb[0].mxu0
    %v2233 = vadd.f32 %v2006, %v2232
    %v2234 = vpop.f32.mrb[0].mxu0
    %v2235 = vadd.f32 %v2010, %v2234
    %v2236 = vpop.f32.mrb[0].mxu0
    %v2237 = vadd.f32 %v2006, %v2236
    %v2238 = vpop.f32.mrb[0].mxu0
    %v2239 = vadd.f32 %v2010, %v2238
    %2240 = vdwg.mxu0
    %2241 = vmatprep.subr.bf16.mxu0 0
    %2242 = vmatpush1.bf16.msra.mxu0 %v1963
    %2243 = vmatprep.subr.bf16.mxu0 0
    %2244 = vmatpush1.bf16.msra.mxu0 %v1970
    %2245 = vmatprep.subr.bf16.mxu0 0
    %2246 = vmatpush1.bf16.msra.mxu0 %v1977
    %2247 = vmatprep.subr.bf16.mxu0 0
    %2248 = vmatpush1.bf16.msra.mxu0 %v1984
    %2249 = vmatprep.subr.bf16.mxu0 0
    %2250 = vmatpush1.bf16.msra.mxu0 0
    %2251 = vmatprep.subr.bf16.mxu0 0
    %2252 = vmatpush1.bf16.msra.mxu0 0
    %2253 = vmatprep.subr.bf16.mxu0 0
    %2254 = vmatpush1.bf16.msra.mxu0 0
    %2255 = vmatprep.subr.bf16.mxu0 0
    %2256 = vmatpush1.bf16.msra.mxu0 0
    %2257 = vmatprep.subr.bf16.mxu0 0
    %2258 = vmatpush1.bf16.msra.mxu0 0
    %2259 = vmatprep.subr.bf16.mxu0 0
    %2260 = vmatpush1.bf16.msra.mxu0 0
    %2261 = vmatprep.subr.bf16.mxu0 0
    %2262 = vmatpush1.bf16.msra.mxu0 0
    %2263 = vmatprep.subr.bf16.mxu0 0
    %2264 = vmatpush1.bf16.msra.mxu0 0
    %2265 = vmatprep.subr.bf16.mxu0 0
    %2266 = vmatpush1.bf16.msra.mxu0 0
    %2267 = vmatprep.subr.bf16.mxu0 0
    %2268 = vmatpush1.bf16.msra.mxu0 0
    %2269 = vmatprep.subr.bf16.mxu0 0
    %2270 = vmatpush1.bf16.msra.mxu0 0
    %2271 = vmatprep.subr.bf16.mxu0 0
    %2272 = vmatpush1.bf16.msra.mxu0 0
    %2273 = vmatprep.mubr.bf16.mxu0 0
    %2274 = vmatmul.mubr.bf16.gmra.mrb[0].mxu0 %v432
    %v2275 = vpop.f32.mrb[0].mxu0
    %v2276 = vadd.f32 %v2014, %v2275
    %v2277 = vpop.f32.mrb[0].mxu0
    %v2278 = vpop.f32.mrb[0].mxu0
    %v2279 = vadd.f32 %v2014, %v2278
    %v2280 = vpop.f32.mrb[0].mxu0
    %2281 = vmatprep.mubr.bf16.mxu0 0
    %2282 = vmatmul.mubr.bf16.gmra.mrb[0].mxu0 %v435
    %v2283 = vpop.f32.mrb[0].mxu0
    %v2284 = vadd.f32 %v2014, %v2283
    %v2285 = vpop.f32.mrb[0].mxu0
    %v2286 = vpop.f32.mrb[0].mxu0
    %v2287 = vadd.f32 %v2014, %v2286
    %v2288 = vpop.f32.mrb[0].mxu0
    %2289 = vmatprep.mubr.bf16.mxu0 0
    %2290 = vmatmul.mubr.bf16.gmra.mrb[0].mxu0 %v438
    %v2291 = vpop.f32.mrb[0].mxu0
    %v2292 = vadd.f32 %v2014, %v2291
    %v2293 = vpop.f32.mrb[0].mxu0
    %v2294 = vpop.f32.mrb[0].mxu0
    %v2295 = vadd.f32 %v2014, %v2294
    %v2296 = vpop.f32.mrb[0].mxu0
    %2297 = vmatprep.mubr.bf16.mxu0 0
    %2298 = vmatmul.mubr.bf16.gmra.mrb[0].mxu0 %v441
    %v2299 = vpop.f32.mrb[0].mxu0
    %v2300 = vadd.f32 %v2014, %v2299
    %v2301 = vpop.f32.mrb[0].mxu0
    %v2302 = vpop.f32.mrb[0].mxu0
    %v2303 = vadd.f32 %v2014, %v2302
    %v2304 = vpop.f32.mrb[0].mxu0
    %2305 = vdwg.mxu0
    %2306 = vst [vmem:[#allocation11] sm:$0xff] %v2057
    %2307 = vst [vmem:[#allocation11 + $0x8] sm:$0xff] %v2059
    %2308 = vst [vmem:[#allocation11 + $0x10] sm:$0xff] %v2130
    %2309 = vst [vmem:[#allocation11 + $0x18] sm:$0xff] %v2132
    %2310 = vst [vmem:[#allocation11 + $0x20] sm:$0xff] %v2203
    %2311 = vst [vmem:[#allocation11 + $0x28] sm:$0xff] %v2205
    %2312 = vst [vmem:[#allocation11 + $0x30] sm:$0xff] %v2276
    %2313 = vst [vmem:[#allocation11 + $0x38] sm:$0xff] %v2061
    %2314 = vst [vmem:[#allocation11 + $0x40] sm:$0xff] %v2063
    %2315 = vst [vmem:[#allocation11 + $0x48] sm:$0xff] %v2134
    %2316 = vst [vmem:[#allocation11 + $0x50] sm:$0xff] %v2136
    %2317 = vst [vmem:[#allocation11 + $0x58] sm:$0xff] %v2207
    %2318 = vst [vmem:[#allocation11 + $0x60] sm:$0xff] %v2209
    %2319 = vst [vmem:[#allocation11 + $0x68] sm:$0xff] %v2279
    %2320 = vst [vmem:[#allocation11 + $0x70] sm:$0xff] %v2067
    %2321 = vst [vmem:[#allocation11 + $0x78] sm:$0xff] %v2069
    %2322 = vst [vmem:[#allocation11 + $0x80] sm:$0xff] %v2140
    %2323 = vst [vmem:[#allocation11 + $0x88] sm:$0xff] %v2142
    %2324 = vst [vmem:[#allocation11 + $0x90] sm:$0xff] %v2213
    %2325 = vst [vmem:[#allocation11 + $0x98] sm:$0xff] %v2215
    %2326 = vst [vmem:[#allocation11 + $0xa0] sm:$0xff] %v2284
    %2327 = vst [vmem:[#allocation11 + $0xa8] sm:$0xff] %v2071
    %2328 = vst [vmem:[#allocation11 + $0xb0] sm:$0xff] %v2073
    %2329 = vst [vmem:[#allocation11 + $0xb8] sm:$0xff] %v2144
    %2330 = vst [vmem:[#allocation11 + $0xc0] sm:$0xff] %v2146
    %2331 = vst [vmem:[#allocation11 + $0xc8] sm:$0xff] %v2217
    %2332 = vst [vmem:[#allocation11 + $0xd0] sm:$0xff] %v2219
    %2333 = vst [vmem:[#allocation11 + $0xd8] sm:$0xff] %v2287
    %2334 = vst [vmem:[#allocation11 + $0xe0] sm:$0xff] %v2077
    %2335 = vst [vmem:[#allocation11 + $0xe8] sm:$0xff] %v2079
    %2336 = vst [vmem:[#allocation11 + $0xf0] sm:$0xff] %v2150
    %2337 = vst [vmem:[#allocation11 + $0xf8] sm:$0xff] %v2152
    %2338 = vst [vmem:[#allocation11 + $0x100] sm:$0xff] %v2223
    %2339 = vst [vmem:[#allocation11 + $0x108] sm:$0xff] %v2225
    %2340 = vst [vmem:[#allocation11 + $0x110] sm:$0xff] %v2292
    %2341 = vst [vmem:[#allocation11 + $0x118] sm:$0xff] %v2081
    %2342 = vst [vmem:[#allocation11 + $0x120] sm:$0xff] %v2083
    %2343 = vst [vmem:[#allocation11 + $0x128] sm:$0xff] %v2154
    %2344 = vst [vmem:[#allocation11 + $0x130] sm:$0xff] %v2156
    %2345 = vst [vmem:[#allocation11 + $0x138] sm:$0xff] %v2227
    %2346 = vst [vmem:[#allocation11 + $0x140] sm:$0xff] %v2229
    %2347 = vst [vmem:[#allocation11 + $0x148] sm:$0xff] %v2295
    %2348 = vst [vmem:[#allocation11 + $0x150] sm:$0xff] %v2087
    %2349 = vst [vmem:[#allocation11 + $0x158] sm:$0xff] %v2089
    %2350 = vst [vmem:[#allocation11 + $0x160] sm:$0xff] %v2160
    %2351 = vst [vmem:[#allocation11 + $0x168] sm:$0xff] %v2162
    %2352 = vst [vmem:[#allocation11 + $0x170] sm:$0xff] %v2233
    %2353 = vst [vmem:[#allocation11 + $0x178] sm:$0xff] %v2235
    %2354 = vst [vmem:[#allocation11 + $0x180] sm:$0xff] %v2300
    %2355 = vst [vmem:[#allocation11 + $0x188] sm:$0xff] %v2091
    %2356 = vst [vmem:[#allocation11 + $0x190] sm:$0xff] %v2093
    %2357 = vst [vmem:[#allocation11 + $0x198] sm:$0xff] %v2164
    %2358 = vst [vmem:[#allocation11 + $0x1a0] sm:$0xff] %v2166
    %2359 = vst [vmem:[#allocation11 + $0x1a8] sm:$0xff] %v2237
    %2360 = vst [vmem:[#allocation11 + $0x1b0] sm:$0xff] %v2239
    %2361 = vst [vmem:[#allocation11 + $0x1b8] sm:$0xff] %v2303
    // Predicated region
    $region46: #{tpu_custom_call.1} parent=1 // pred_check
      _
    $region47: #{tpu_custom_call.1} parent=1 // pred_check_branch
      %2363 = sbr.rel (0) target = $region49
    $region48: #{tpu_custom_call.1} parent=1 // pred_region
      %s2365 = ssub.s32 7168, 7168
      %2366 = vsyncadd [#allocation4], %s2365
      %s2367 = sshll.u32 [#allocation11], 4
      %s2368 = int_to_ptr.vmem [resolvable:$true] %s2367
      %2373 = dma.vmem_to_hbm [thread:$0]  %s2368, 7168, %s6, [#allocation4], 896, 896, 56
    $region49: #{tpu_custom_call.1} parent=1 // pred_fallthru
      _
    // Predicated region
    $region50: #{tpu_custom_call.1} parent=1 // pred_check
      _
    $region51: #{tpu_custom_call.1} parent=1 // pred_check_branch
      %2375 = sbr.rel (0) target = $region53
    $region52: #{tpu_custom_call.1} parent=1 // pred_region
      %2376 = dma.done [#allocation4], 7168
    $region53: #{tpu_custom_call.1} parent=1 // pred_fallthru
      _
    %2377 = vsyncpa [#allocation3], 1
    %2378 = vsyncpa [#allocation6], 1
    %2379 = vsyncpa [#allocation9], 1
    %2380 = vsyncpa [#allocation4], 1

</llo_original>
